<compile_context>
chip_gen: v6e
topology: v6e:2x2x1
jax: 0.10.0
libtpu: 0.0.40
codegen_flags: <defaults>
</compile_context>

<pallas_src>
import functools

import jax
import jax.numpy as jnp
import numpy as np
from jax import lax
from jax.experimental import pallas as pl
from jax.experimental.pallas import tpu as pltpu


def _chain_kernel(x_ref, w01_ref, bias_ref, w2_ref, b2t_ref, b2_ref, out_ref, *, C2):
    """Whole chain for one image: two large matmuls + sigmoid + phase-blocked stores.

    x_ref   : (169, 108)  layer-1-structured im2col of x1 (9 taps x 12 layer-0 inputs per pixel)
    w01_ref : (108, 64)   composed weights  W0 @ W1_tap, stacked over the 9 taps
    bias_ref: (169, 64)   per-pixel bias:  (valid taps) * (b0 @ W1_tap)  summed, plus b1
    w2_ref  : (64, 512)   layer-2 phase-packed weight (4 live phases on the output dim)
    b2t_ref : (1, 512)    b2 tiled over the 4 live phases
    b2_ref  : (1, 128)    b2
    out_ref : (169, 1152) phase-blocked output block; lane block index = 3*p + q
    """
    f32 = jnp.float32
    m = x_ref.shape[0]

    # Layers 0+1 fused: one MXU pass, M=169, K=108.
    v3 = jnp.dot(x_ref[...], w01_ref[...], preferred_element_type=f32) + bias_ref[...]
    # (torch's v2 = relu(v1) is dead code -- it never reaches the output; skipped.)

    # Layer 2 (k=2, s=3), phase decomposition: taps live on the output dim.  M=169, K=64, N=512.
    y = jnp.dot(v3, w2_ref[...], preferred_element_type=f32) + b2t_ref[...]
    y = jax.nn.sigmoid(y)                                            # (169, 4*C2)

    # Phases with p == 2 or q == 2 receive no input taps -> pure sigmoid(bias).
    fill = jnp.broadcast_to(jax.nn.sigmoid(b2_ref[...]), (m, C2))

    for p in range(3):
        for q in range(3):
            blk = 3 * p + q
            if p < 2 and q < 2:
                out_ref[:, blk * C2:(blk + 1) * C2] = y[:, (2 * p + q) * C2:(2 * p + q + 1) * C2]
            else:
                out_ref[:, blk * C2:(blk + 1) * C2] = fill


def _convt_out(h, k, s):
    return (h - 1) * s + k


def model_forward(params, x1_nchw):
    (w0, b0), (w1, b1), (w2, b2) = params
    N, cin, H0, W0 = x1_nchw.shape
    assert cin == 3 and w0.shape == (3, 16, 2, 2), (x1_nchw.shape, w0.shape)
    C1 = w1.shape[1]                                        # 64
    C2 = w2.shape[1]                                        # 128
    H1, W1 = _convt_out(H0, 2, 1), _convt_out(W0, 2, 1)     # 6, 6
    H3, W3 = _convt_out(H1, 3, 2), _convt_out(W1, 3, 2)     # 13, 13
    H4, W4 = _convt_out(H3, 2, 3), _convt_out(W3, 2, 3)     # 38, 38
    M = H3 * W3                                             # 169 output pixels per image

    # ------------- input-side layout prep (XLA glue on ~200 KiB, no model arithmetic) -------------
    # Layer-0 im2col: x0col[n, h, w, :] is the 12-vector feeding v1[n, h, w, :] (flipped-kernel
    # direct-conv form of ConvT k=2 s=1).
    x = jnp.transpose(x1_nchw, (0, 2, 3, 1))                           # NHWC (N,5,5,3)
    xp = jnp.pad(x, ((0, 0), (1, 1), (1, 1), (0, 0)))                  # pad k-1 = 1
    x0col = jnp.concatenate([xp[:, kh:kh + H1, kw:kw + W1, :]
                             for kh in range(2) for kw in range(2)], axis=-1)   # (N,H1,W1,12)

    # Layer-1 structure: stride-2 dilate + pad-2, then the 9 (kh,kw) window slabs, lane-concat.
    DH, DW = 2 * H1 + 3, 2 * W1 + 3                                    # 15, 15
    x0dil = jnp.zeros((N, DH, DW, 12), x0col.dtype)
    x0dil = x0dil.at[:, 2:2 + 2 * H1:2, 2:2 + 2 * W1:2, :].set(x0col)
    xcat = jnp.concatenate([x0dil[:, kh:kh + H3, kw:kw + W3, :]
                            for kh in range(3) for kw in range(3)], axis=-1)    # (N,H3,W3,108)
    xcat = xcat.reshape(N, M, 9 * 12)

    # ------------- weight-side prep (constants only) -------------
    # ConvT == direct conv with spatially flipped kernel (layers 0 and 1).
    w0p = jnp.concatenate([w0[:, :, 1 - kh, 1 - kw]
                           for kh in range(2) for kw in range(2)], axis=0)      # (12,16)
    w1f = [w1[:, :, 2 - kh, 2 - kw] for kh in range(3) for kw in range(3)]      # 9 x (16,64)
    # Compose layers 0 and 1:  (x @ W0) @ W1_t == x @ (W0 @ W1_t).
    w01 = jnp.concatenate([w0p @ wt for wt in w1f], axis=0)                     # (108,64)
    b01 = jnp.stack([b0 @ wt for wt in w1f], axis=0)                            # (9,64)

    # Which of the 9 taps hit a real v1 pixel for each output position (static structure).
    valid = np.zeros((M, 9), np.float32)
    for a in range(H3):
        for c in range(W3):
            for kh in range(3):
                for kw in range(3):
                    hi, wi = a + kh - 2, c + kw - 2
                    if (hi >= 0 and hi % 2 == 0 and hi // 2 < H1 and
                            wi >= 0 and wi % 2 == 0 and wi // 2 < W1):
                        valid[a * W3 + c, kh * 3 + kw] = 1.0
    biasmat = jnp.asarray(valid) @ b01 + b1.reshape(1, C1)                      # (169,64)

    # Layer-2 phase decomposition uses the un-flipped taps on the output dim.
    w2p = jnp.concatenate([w2[:, :, p, q]
                           for p in range(2) for q in range(2)], axis=1)        # (64,512)
    b2t = jnp.tile(b2.reshape(1, C2), (1, 4))                                   # (1,512)
    b2r = b2.reshape(1, C2)                                                     # (1,128)

    kernel = functools.partial(_chain_kernel, C2=C2)
    out_blk = pl.pallas_call(
        kernel,
        out_shape=jax.ShapeDtypeStruct((N, M, 9 * C2), jnp.float32),
        grid=(N,),
        in_specs=[
            pl.BlockSpec((None, M, 9 * 12), lambda i: (i, 0, 0)),   # xcat (per-image block)
            pl.BlockSpec((9 * 12, C1), lambda i: (0, 0)),           # w01
            pl.BlockSpec((M, C1), lambda i: (0, 0)),                # biasmat (same for all n)
            pl.BlockSpec((C1, 4 * C2), lambda i: (0, 0)),           # w2p
            pl.BlockSpec((1, 4 * C2), lambda i: (0, 0)),            # b2 tiled
            pl.BlockSpec((1, C2), lambda i: (0, 0)),                # b2
        ],
        out_specs=pl.BlockSpec((None, M, 9 * C2), lambda i: (i, 0, 0)),
        compiler_params=pltpu.CompilerParams(dimension_semantics=("parallel",)),
    )(xcat, w01, biasmat, w2p, b2t, b2r)

    # ------------- depth-to-space + NCHW, fused into a single transpose pass -------------
    o = out_blk.reshape(N, H3, W3, 3, 3, C2)           # (n, a, c, p, q, co)
    o = o.transpose(0, 5, 1, 3, 2, 4)                  # (n, co, a, p, c, q)
    o = o.reshape(N, C2, 3 * H3, 3 * W3)[:, :, :H4, :W4]
    return o                                            # NCHW (N,128,38,38)


# ------------------------- parameters (deterministic) -------------------------
def init_params(key):
    def init_convt(kw_, kb_, cin, cout, k):
        bound = 1.0 / np.sqrt(cin * k * k)
        w = jax.random.uniform(kw_, (cin, cout, k, k), jnp.float32, -bound, bound)
        bb = jax.random.uniform(kb_, (cout,), jnp.float32, -bound, bound)
        return w, bb

    k1, k2, k3, k4, k5, k6 = jax.random.split(key, 6)
    # TODO(synk): the original module declares conv1 = ConvTranspose2d(32, 64, 3, 2) but feeds it
    # the 16-channel output of conv (this would raise in PyTorch); we use in_channels=16 so the
    # forward composes.
    w0, b0 = init_convt(k1, k2, 3, 16, 2)     # conv  : 3  -> 16,  k=2, s=1
    w1, b1 = init_convt(k3, k4, 16, 64, 3)    # conv1 : 16 -> 64,  k=3, s=2
    w2, b2 = init_convt(k5, k6, 64, 128, 2)   # conv2 : 64 -> 128, k=2, s=3
    return (w0, b0), (w1, b1), (w2, b2)


# ------------------------- pure-JAX reference for checking -------------------------
def conv_transpose_ref(x, w_pt, b, stride):
    cin, cout, kh, kw = w_pt.shape
    w_conv = jnp.transpose(jnp.flip(w_pt, axis=(2, 3)), (1, 0, 2, 3))  # (Cout,Cin,kH,kW)
    y = lax.conv_general_dilated(
        x, w_conv, window_strides=(1, 1),
        padding=[(kh - 1, kh - 1), (kw - 1, kw - 1)],
        lhs_dilation=(stride, stride),
        dimension_numbers=('NCHW', 'OIHW', 'NCHW'))
    return y + b.reshape(1, cout, 1, 1)


def model_forward_ref(params, x1):
    (w0, b0), (w1, b1), (w2, b2) = params
    v1 = conv_transpose_ref(x1, w0, b0, 1)
    v3 = conv_transpose_ref(v1, w1, b1, 2)
    v4 = jax.nn.sigmoid(conv_transpose_ref(v3, w2, b2, 3))
    return v4


if __name__ == "__main__":
    key = jax.random.PRNGKey(0)
    kx, kp = jax.random.split(key)
    x1 = jax.random.normal(kx, (3, 3, 5, 5), jnp.float32)   # matches torch.randn(3,3,5,5)
    params = init_params(kp)

    fwd = jax.jit(model_forward)
    out = jax.block_until_ready(fwd(params, x1))
    assert out.shape == (3, 128, 38, 38), out.shape

    ref = jax.block_until_ready(jax.jit(model_forward_ref)(params, x1))
    np.testing.assert_allclose(np.asarray(out), np.asarray(ref), rtol=5e-4, atol=5e-5)

    print("KERNEL_OK")
</pallas_src>

<mosaic_0001>
module attributes {stable_mosaic.version = 11 : i64} {
  func.func @_chain_kernel(%arg0: i32, %arg1: memref<1x169x108xf32, #tpu.memory_space<vmem>>, %arg2: memref<108x64xf32, #tpu.memory_space<vmem>>, %arg3: memref<169x64xf32, #tpu.memory_space<vmem>>, %arg4: memref<64x512xf32, #tpu.memory_space<vmem>>, %arg5: memref<1x512xf32, #tpu.memory_space<vmem>>, %arg6: memref<1x128xf32, #tpu.memory_space<vmem>>, %arg7: memref<1x169x1152xf32, #tpu.memory_space<vmem>>) attributes {dimension_semantics = [#tpu.dimension_semantics<parallel>], iteration_bounds = array<i64: 3>, scalar_prefetch = 0 : i64, scratch_operands = 0 : i64, tpu.core_type = #tpu.core_type<tc>, window_params = [{transform_indices = @transform_0, window_bounds = array<i64: 1, 169, 108>}, {pipeline_mode = #tpu.pipeline_mode<synchronous>, transform_indices = @transform_1, window_bounds = array<i64: 108, 64>}, {pipeline_mode = #tpu.pipeline_mode<synchronous>, transform_indices = @transform_2, window_bounds = array<i64: 169, 64>}, {pipeline_mode = #tpu.pipeline_mode<synchronous>, transform_indices = @transform_3, window_bounds = array<i64: 64, 512>}, {pipeline_mode = #tpu.pipeline_mode<synchronous>, transform_indices = @transform_4, window_bounds = array<i64: 1, 512>}, {pipeline_mode = #tpu.pipeline_mode<synchronous>, transform_indices = @transform_5, window_bounds = array<i64: 1, 128>}, {transform_indices = @transform_6, window_bounds = array<i64: 1, 169, 1152>}]} {
    %c0 = arith.constant 0 : index
    %c0_0 = arith.constant 0 : index
    %c0_1 = arith.constant 0 : index
    %0 = vector.load %arg1[%c0, %c0_0, %c0_1] : memref<1x169x108xf32, #tpu.memory_space<vmem>>, vector<1x169x108xf32>
    %1 = vector.shape_cast %0 : vector<1x169x108xf32> to vector<169x108xf32>
    %c0_2 = arith.constant 0 : index
    %c0_3 = arith.constant 0 : index
    %2 = vector.load %arg2[%c0_2, %c0_3] : memref<108x64xf32, #tpu.memory_space<vmem>>, vector<108x64xf32>
    %cst = arith.constant dense<0.000000e+00> : vector<169x64xf32>
    %3 = tpu.matmul %1, %2, %cst {dimension_numbers = #tpu.dot_dimension_numbers<[1], [0], [0], [1], [0, 0, 1, 1], [], []>} : vector<169x108xf32>, vector<108x64xf32>, vector<169x64xf32> -> vector<169x64xf32>
    %c0_4 = arith.constant 0 : index
    %c0_5 = arith.constant 0 : index
    %4 = vector.load %arg3[%c0_4, %c0_5] : memref<169x64xf32, #tpu.memory_space<vmem>>, vector<169x64xf32>
    %5 = arith.addf %3, %4 : vector<169x64xf32>
    %c0_6 = arith.constant 0 : index
    %c0_7 = arith.constant 0 : index
    %6 = vector.load %arg4[%c0_6, %c0_7] : memref<64x512xf32, #tpu.memory_space<vmem>>, vector<64x512xf32>
    %cst_8 = arith.constant dense<0.000000e+00> : vector<169x512xf32>
    %7 = tpu.matmul %5, %6, %cst_8 {dimension_numbers = #tpu.dot_dimension_numbers<[1], [0], [0], [1], [0, 0, 1, 1], [], []>} : vector<169x64xf32>, vector<64x512xf32>, vector<169x512xf32> -> vector<169x512xf32>
    %c0_9 = arith.constant 0 : index
    %c0_10 = arith.constant 0 : index
    %8 = vector.load %arg5[%c0_9, %c0_10] : memref<1x512xf32, #tpu.memory_space<vmem>>, vector<1x512xf32>
    %9 = vector.broadcast %8 : vector<1x512xf32> to vector<169x512xf32>
    %10 = arith.addf %7, %9 : vector<169x512xf32>
    %11 = arith.negf %10 : vector<169x512xf32>
    %12 = math.exp %11 : vector<169x512xf32>
    %cst_11 = arith.constant 1.000000e+00 : f32
    %13 = vector.broadcast %cst_11 : f32 to vector<169x512xf32>
    %14 = arith.addf %13, %12 : vector<169x512xf32>
    %15 = arith.divf %13, %14 : vector<169x512xf32>
    %c0_12 = arith.constant 0 : index
    %c0_13 = arith.constant 0 : index
    %16 = vector.load %arg6[%c0_12, %c0_13] : memref<1x128xf32, #tpu.memory_space<vmem>>, vector<1x128xf32>
    %17 = arith.negf %16 : vector<1x128xf32>
    %18 = math.exp %17 : vector<1x128xf32>
    %cst_14 = arith.constant 1.000000e+00 : f32
    %19 = vector.broadcast %cst_14 : f32 to vector<1x128xf32>
    %20 = arith.addf %19, %18 : vector<1x128xf32>
    %21 = arith.divf %19, %20 : vector<1x128xf32>
    %22 = vector.shape_cast %21 : vector<1x128xf32> to vector<1x128xf32>
    %23 = vector.broadcast %22 : vector<1x128xf32> to vector<169x128xf32>
    %24 = vector.extract_strided_slice %15 {offsets = [0, 0], sizes = [169, 128], strides = [1, 1]} : vector<169x512xf32> to vector<169x128xf32>
    %c0_15 = arith.constant 0 : index
    %c0_16 = arith.constant 0 : index
    %c0_17 = arith.constant 0 : index
    %25 = vector.load %arg7[%c0_15, %c0_16, %c0_17] : memref<1x169x1152xf32, #tpu.memory_space<vmem>>, vector<1x169x128xf32>
    %26 = vector.shape_cast %25 : vector<1x169x128xf32> to vector<169x128xf32>
    %27 = vector.shape_cast %24 : vector<169x128xf32> to vector<1x169x128xf32>
    tpu.vector_store %arg7[%c0_15, %c0_16, %c0_17], %27 {strides = array<i32>} : memref<1x169x1152xf32, #tpu.memory_space<vmem>>, vector<1x169x128xf32>,
    %28 = vector.extract_strided_slice %15 {offsets = [0, 128], sizes = [169, 128], strides = [1, 1]} : vector<169x512xf32> to vector<169x128xf32>
    %c0_18 = arith.constant 0 : index
    %c0_19 = arith.constant 0 : index
    %c128 = arith.constant 128 : index
    %29 = vector.load %arg7[%c0_18, %c0_19, %c128] : memref<1x169x1152xf32, #tpu.memory_space<vmem>>, vector<1x169x128xf32>
    %30 = vector.shape_cast %29 : vector<1x169x128xf32> to vector<169x128xf32>
    %31 = vector.shape_cast %28 : vector<169x128xf32> to vector<1x169x128xf32>
    tpu.vector_store %arg7[%c0_18, %c0_19, %c128], %31 {strides = array<i32>} : memref<1x169x1152xf32, #tpu.memory_space<vmem>>, vector<1x169x128xf32>,
    %c0_20 = arith.constant 0 : index
    %c0_21 = arith.constant 0 : index
    %c256 = arith.constant 256 : index
    %32 = vector.load %arg7[%c0_20, %c0_21, %c256] : memref<1x169x1152xf32, #tpu.memory_space<vmem>>, vector<1x169x128xf32>
    %33 = vector.shape_cast %32 : vector<1x169x128xf32> to vector<169x128xf32>
    %34 = vector.shape_cast %23 : vector<169x128xf32> to vector<1x169x128xf32>
    tpu.vector_store %arg7[%c0_20, %c0_21, %c256], %34 {strides = array<i32>} : memref<1x169x1152xf32, #tpu.memory_space<vmem>>, vector<1x169x128xf32>,
    %35 = vector.extract_strided_slice %15 {offsets = [0, 256], sizes = [169, 128], strides = [1, 1]} : vector<169x512xf32> to vector<169x128xf32>
    %c0_22 = arith.constant 0 : index
    %c0_23 = arith.constant 0 : index
    %c384 = arith.constant 384 : index
    %36 = vector.load %arg7[%c0_22, %c0_23, %c384] : memref<1x169x1152xf32, #tpu.memory_space<vmem>>, vector<1x169x128xf32>
    %37 = vector.shape_cast %36 : vector<1x169x128xf32> to vector<169x128xf32>
    %38 = vector.shape_cast %35 : vector<169x128xf32> to vector<1x169x128xf32>
    tpu.vector_store %arg7[%c0_22, %c0_23, %c384], %38 {strides = array<i32>} : memref<1x169x1152xf32, #tpu.memory_space<vmem>>, vector<1x169x128xf32>,
    %39 = vector.extract_strided_slice %15 {offsets = [0, 384], sizes = [169, 128], strides = [1, 1]} : vector<169x512xf32> to vector<169x128xf32>
    %c0_24 = arith.constant 0 : index
    %c0_25 = arith.constant 0 : index
    %c512 = arith.constant 512 : index
    %40 = vector.load %arg7[%c0_24, %c0_25, %c512] : memref<1x169x1152xf32, #tpu.memory_space<vmem>>, vector<1x169x128xf32>
    %41 = vector.shape_cast %40 : vector<1x169x128xf32> to vector<169x128xf32>
    %42 = vector.shape_cast %39 : vector<169x128xf32> to vector<1x169x128xf32>
    tpu.vector_store %arg7[%c0_24, %c0_25, %c512], %42 {strides = array<i32>} : memref<1x169x1152xf32, #tpu.memory_space<vmem>>, vector<1x169x128xf32>,
    %c0_26 = arith.constant 0 : index
    %c0_27 = arith.constant 0 : index
    %c640 = arith.constant 640 : index
    %43 = vector.load %arg7[%c0_26, %c0_27, %c640] : memref<1x169x1152xf32, #tpu.memory_space<vmem>>, vector<1x169x128xf32>
    %44 = vector.shape_cast %43 : vector<1x169x128xf32> to vector<169x128xf32>
    %45 = vector.shape_cast %23 : vector<169x128xf32> to vector<1x169x128xf32>
    tpu.vector_store %arg7[%c0_26, %c0_27, %c640], %45 {strides = array<i32>} : memref<1x169x1152xf32, #tpu.memory_space<vmem>>, vector<1x169x128xf32>,
    %c0_28 = arith.constant 0 : index
    %c0_29 = arith.constant 0 : index
    %c768 = arith.constant 768 : index
    %46 = vector.load %arg7[%c0_28, %c0_29, %c768] : memref<1x169x1152xf32, #tpu.memory_space<vmem>>, vector<1x169x128xf32>
    %47 = vector.shape_cast %46 : vector<1x169x128xf32> to vector<169x128xf32>
    %48 = vector.shape_cast %23 : vector<169x128xf32> to vector<1x169x128xf32>
    tpu.vector_store %arg7[%c0_28, %c0_29, %c768], %48 {strides = array<i32>} : memref<1x169x1152xf32, #tpu.memory_space<vmem>>, vector<1x169x128xf32>,
    %c0_30 = arith.constant 0 : index
    %c0_31 = arith.constant 0 : index
    %c896 = arith.constant 896 : index
    %49 = vector.load %arg7[%c0_30, %c0_31, %c896] : memref<1x169x1152xf32, #tpu.memory_space<vmem>>, vector<1x169x128xf32>
    %50 = vector.shape_cast %49 : vector<1x169x128xf32> to vector<169x128xf32>
    %51 = vector.shape_cast %23 : vector<169x128xf32> to vector<1x169x128xf32>
    tpu.vector_store %arg7[%c0_30, %c0_31, %c896], %51 {strides = array<i32>} : memref<1x169x1152xf32, #tpu.memory_space<vmem>>, vector<1x169x128xf32>,
    %c0_32 = arith.constant 0 : index
    %c0_33 = arith.constant 0 : index
    %c1024 = arith.constant 1024 : index
    %52 = vector.load %arg7[%c0_32, %c0_33, %c1024] : memref<1x169x1152xf32, #tpu.memory_space<vmem>>, vector<1x169x128xf32>
    %53 = vector.shape_cast %52 : vector<1x169x128xf32> to vector<169x128xf32>
    %54 = vector.shape_cast %23 : vector<169x128xf32> to vector<1x169x128xf32>
    tpu.vector_store %arg7[%c0_32, %c0_33, %c1024], %54 {strides = array<i32>} : memref<1x169x1152xf32, #tpu.memory_space<vmem>>, vector<1x169x128xf32>,
    return
  }
  func.func @transform_0(%arg0: i32) -> (i32, i32, i32) {
    %c0_i32 = arith.constant 0 : i32
    %c0_i32_0 = arith.constant 0 : i32
    %c0_i32_1 = arith.constant 0 : i32
    return %arg0, %c0_i32, %c0_i32_0 : i32, i32, i32
  }
  func.func @transform_1(%arg0: i32) -> (i32, i32) {
    %c0_i32 = arith.constant 0 : i32
    %c0_i32_0 = arith.constant 0 : i32
    %c0_i32_1 = arith.constant 0 : i32
    return %c0_i32, %c0_i32_0 : i32, i32
  }
  func.func @transform_2(%arg0: i32) -> (i32, i32) {
    %c0_i32 = arith.constant 0 : i32
    %c0_i32_0 = arith.constant 0 : i32
    %c0_i32_1 = arith.constant 0 : i32
    return %c0_i32, %c0_i32_0 : i32, i32
  }
  func.func @transform_3(%arg0: i32) -> (i32, i32) {
    %c0_i32 = arith.constant 0 : i32
    %c0_i32_0 = arith.constant 0 : i32
    %c0_i32_1 = arith.constant 0 : i32
    return %c0_i32, %c0_i32_0 : i32, i32
  }
  func.func @transform_4(%arg0: i32) -> (i32, i32) {
    %c0_i32 = arith.constant 0 : i32
    %c0_i32_0 = arith.constant 0 : i32
    %c0_i32_1 = arith.constant 0 : i32
    return %c0_i32, %c0_i32_0 : i32, i32
  }
  func.func @transform_5(%arg0: i32) -> (i32, i32) {
    %c0_i32 = arith.constant 0 : i32
    %c0_i32_0 = arith.constant 0 : i32
    %c0_i32_1 = arith.constant 0 : i32
    return %c0_i32, %c0_i32_0 : i32, i32
  }
  func.func @transform_6(%arg0: i32) -> (i32, i32, i32) {
    %c0_i32 = arith.constant 0 : i32
    %c0_i32_0 = arith.constant 0 : i32
    %c0_i32_1 = arith.constant 0 : i32
    return %arg0, %c0_i32, %c0_i32_0 : i32, i32, i32
  }
}

</mosaic_0001>

<llo_original>
// kernel: model_forward.1
$region0: #{model_forward.1}
  #allocation0 [shape = 'u32[]', space=smem, size = 0x4, offset = 0x4, fixed_abs, tag = 'smem constant byte address 0x4 - core index']
  #allocation1 [shape = 'u32[144,128]{1,0:T(1,128)}', space=vmem, size = 0x12000, scoped, tag = 'internal scratch']
  %s0 = inlined_call_operand.vmem [shape: f32[3,169,108], index: 0, kind: input, shape index: {}]
  %s1 = inlined_call_operand.vmem [shape: f32[108,64], index: 1, kind: input, shape index: {}]
  %s2 = inlined_call_operand.vmem [shape: f32[169,64], index: 2, kind: input, shape index: {}]
  %s3 = inlined_call_operand.vmem [shape: f32[64,512], index: 3, kind: input, shape index: {}]
  %s4 = inlined_call_operand.vmem [shape: f32[1,512], index: 4, kind: input, shape index: {}]
  %s5 = inlined_call_operand.vmem [shape: f32[1,128], index: 5, kind: input, shape index: {}]
  %s6 = inlined_call_operand.vmem [shape: f32[3,169,1152], index: 6, kind: output, shape index: {}]
  %s7 = sld [smem:[#allocation0]]
  $region57: #{model_forward.1} parent=0
    _
  %s9 = ssub.s32 1, %s7
  %s10 = scalar_select 0, %s9, %s7
  loop: start=0, step=1, limit=5
  $region2: #{model_forward.1} parent=0 // loop_pre_header
    _
  $region3: #{model_forward.1} parent=0 // loop_header
    %s12 = sphi 0, %s16
    %p13 = scmp.ge.s32.totalorder %s12, 5
    %s22 = sphi 0, %s24
    %s25 = sphi 0, %s22
    %s26 = sphi 0, %s25
    %s42 = sphi 0, %s26
    %s46 = sphi 0, %s46
    %s48 = sphi 0, %s46
    %s49 = sphi 0, %s48
    %s63 = sphi 0, %s49
    %s67 = sphi 0, %s67
    %s69 = sphi 0, %s67
    %s70 = sphi 0, %s69
    %s84 = sphi 0, %s70
    %s88 = sphi 0, %s88
    %s90 = sphi 0, %s88
    %s91 = sphi 0, %s90
    %s105 = sphi 0, %s91
    %s109 = sphi 0, %s109
    %s111 = sphi 0, %s109
    %s112 = sphi 0, %s111
    %s126 = sphi 0, %s112
    %s130 = sphi 0, %s130
    %s132 = sphi 0, %s130
    %s133 = sphi 0, %s132
    %s147 = sphi 0, %s133
    %s153 = sphi 0, %s155
    %s156 = sphi 0, %s153
    %s157 = sphi 0, %s156
    %s173 = sphi 0, %s157
  $region4: #{model_forward.1} parent=0 // loop_header_branch
    %15 = sbr.rel (%p13) target = $region8
  $region5: #{model_forward.1} parent=0 // loop_body
    %s17 = ssub.s32 %s12, 1
    %s18 = ssub.s32 %s12, 2
    %s19 = sadd.s32 %s12, 1
    %s20 = ssub.s32 %s12, %s19
    %p21 = scmp.eq.s32.totalorder %s20, 0
    %s23 = sadd.s32 %s22, 1
    %s24 = scalar_select %p21, %s22, %s23
    %p27 = pneg %p21
    %p28 = scmp.eq.s32.totalorder %s12, 2
    %p29 = por %p27, %p28
    %p30 = scmp.ne.s32.totalorder %s22, %s25
    %p31 = scmp.eq.s32.totalorder %s12, 0
    %p32 = por %p30, %p31
    %p33 = scmp.ne.s32.totalorder %s22, %s25
    %p34 = scmp.eq.s32.totalorder %s17, 2
    %p35 = por %p33, %p34
    %p36 = scmp.ne.s32.totalorder %s25, %s26
    %p37 = scmp.eq.s32.totalorder %s17, 0
    %p38 = por %p36, %p37
    %p39 = scmp.ne.s32.totalorder %s25, %s26
    %p40 = scmp.eq.s32.totalorder %s18, 2
    %p41 = por %p39, %p40
    %p43 = scmp.ne.s32.totalorder %s26, %s42
    %p44 = scmp.eq.s32.totalorder %s18, 0
    %p45 = por %p43, %p44
    %s47 = sadd.s32 %s46, 1
    %p50 = scmp.eq.s32.totalorder %s12, 2
    %p51 = scmp.ne.s32.totalorder %s46, %s48
    %p52 = scmp.eq.s32.totalorder %s12, 0
    %p53 = por %p51, %p52
    %p54 = scmp.ne.s32.totalorder %s46, %s48
    %p55 = scmp.eq.s32.totalorder %s17, 2
    %p56 = por %p54, %p55
    %p57 = scmp.ne.s32.totalorder %s48, %s49
    %p58 = scmp.eq.s32.totalorder %s17, 0
    %p59 = por %p57, %p58
    %p60 = scmp.ne.s32.totalorder %s48, %s49
    %p61 = scmp.eq.s32.totalorder %s18, 2
    %p62 = por %p60, %p61
    %p64 = scmp.ne.s32.totalorder %s49, %s63
    %p65 = scmp.eq.s32.totalorder %s18, 0
    %p66 = por %p64, %p65
    %s68 = sadd.s32 %s67, 1
    %p71 = scmp.eq.s32.totalorder %s12, 2
    %p72 = scmp.ne.s32.totalorder %s67, %s69
    %p73 = scmp.eq.s32.totalorder %s12, 0
    %p74 = por %p72, %p73
    %p75 = scmp.ne.s32.totalorder %s67, %s69
    %p76 = scmp.eq.s32.totalorder %s17, 2
    %p77 = por %p75, %p76
    %p78 = scmp.ne.s32.totalorder %s69, %s70
    %p79 = scmp.eq.s32.totalorder %s17, 0
    %p80 = por %p78, %p79
    %p81 = scmp.ne.s32.totalorder %s69, %s70
    %p82 = scmp.eq.s32.totalorder %s18, 2
    %p83 = por %p81, %p82
    %p85 = scmp.ne.s32.totalorder %s70, %s84
    %p86 = scmp.eq.s32.totalorder %s18, 0
    %p87 = por %p85, %p86
    %s89 = sadd.s32 %s88, 1
    %p92 = scmp.eq.s32.totalorder %s12, 2
    %p93 = scmp.ne.s32.totalorder %s88, %s90
    %p94 = scmp.eq.s32.totalorder %s12, 0
    %p95 = por %p93, %p94
    %p96 = scmp.ne.s32.totalorder %s88, %s90
    %p97 = scmp.eq.s32.totalorder %s17, 2
    %p98 = por %p96, %p97
    %p99 = scmp.ne.s32.totalorder %s90, %s91
    %p100 = scmp.eq.s32.totalorder %s17, 0
    %p101 = por %p99, %p100
    %p102 = scmp.ne.s32.totalorder %s90, %s91
    %p103 = scmp.eq.s32.totalorder %s18, 2
    %p104 = por %p102, %p103
    %p106 = scmp.ne.s32.totalorder %s91, %s105
    %p107 = scmp.eq.s32.totalorder %s18, 0
    %p108 = por %p106, %p107
    %s110 = sadd.s32 %s109, 1
    %p113 = scmp.eq.s32.totalorder %s12, 2
    %p114 = scmp.ne.s32.totalorder %s109, %s111
    %p115 = scmp.eq.s32.totalorder %s12, 0
    %p116 = por %p114, %p115
    %p117 = scmp.ne.s32.totalorder %s109, %s111
    %p118 = scmp.eq.s32.totalorder %s17, 2
    %p119 = por %p117, %p118
    %p120 = scmp.ne.s32.totalorder %s111, %s112
    %p121 = scmp.eq.s32.totalorder %s17, 0
    %p122 = por %p120, %p121
    %p123 = scmp.ne.s32.totalorder %s111, %s112
    %p124 = scmp.eq.s32.totalorder %s18, 2
    %p125 = por %p123, %p124
    %p127 = scmp.ne.s32.totalorder %s112, %s126
    %p128 = scmp.eq.s32.totalorder %s18, 0
    %p129 = por %p127, %p128
    %s131 = sadd.s32 %s130, 1
    %p134 = scmp.eq.s32.totalorder %s12, 2
    %p135 = scmp.ne.s32.totalorder %s130, %s132
    %p136 = scmp.eq.s32.totalorder %s12, 0
    %p137 = por %p135, %p136
    %p138 = scmp.ne.s32.totalorder %s130, %s132
    %p139 = scmp.eq.s32.totalorder %s17, 2
    %p140 = por %p138, %p139
    %p141 = scmp.ne.s32.totalorder %s132, %s133
    %p142 = scmp.eq.s32.totalorder %s17, 0
    %p143 = por %p141, %p142
    %p144 = scmp.ne.s32.totalorder %s132, %s133
    %p145 = scmp.eq.s32.totalorder %s18, 2
    %p146 = por %p144, %p145
    %p148 = scmp.ne.s32.totalorder %s133, %s147
    %p149 = scmp.eq.s32.totalorder %s18, 0
    %p150 = por %p148, %p149
    %s151 = ssub.s32 %s12, %s19
    %p152 = scmp.eq.s32.totalorder %s151, 0
    %s154 = sadd.s32 %s153, 1
    %s155 = scalar_select %p152, %s153, %s154
    %p158 = pneg %p152
    %p159 = scmp.eq.s32.totalorder %s12, 2
    %p160 = por %p158, %p159
    %p161 = scmp.ne.s32.totalorder %s153, %s156
    %p162 = scmp.eq.s32.totalorder %s12, 0
    %p163 = por %p161, %p162
    %p164 = scmp.ne.s32.totalorder %s153, %s156
    %p165 = scmp.eq.s32.totalorder %s17, 2
    %p166 = por %p164, %p165
    %p167 = scmp.ne.s32.totalorder %s156, %s157
    %p168 = scmp.eq.s32.totalorder %s17, 0
    %p169 = por %p167, %p168
    %p170 = scmp.ne.s32.totalorder %s156, %s157
    %p171 = scmp.eq.s32.totalorder %s18, 2
    %p172 = por %p170, %p171
    %p174 = scmp.ne.s32.totalorder %s157, %s173
    %p175 = scmp.eq.s32.totalorder %s18, 0
    %p176 = por %p174, %p175
    %p177 = scmp.le.s32.totalorder 1, %s12
    %p178 = scmp.lt.s32.totalorder %s12, 4
    %p179 = pnand %p177, %p178
    %p180 = pneg %p179
    // Predicated region
    $region9: #{model_forward.1} parent=5 // pred_check
      _
    $region10: #{model_forward.1} parent=5 // pred_check_branch
      %182 = sbr.rel (%p179) target = $region12
    $region11: #{model_forward.1} parent=5 // pred_region
      %s183 = ssub.s32 %s12, 1
      // Predicated region
      $region13: #{model_forward.1} parent=11 // pred_check
        %p184 = pneg %p59
      $region14: #{model_forward.1} parent=11 // pred_check_branch
        %186 = sbr.rel (%p184) target = $region16
      $region15: #{model_forward.1} parent=11 // pred_region
        _
      $region16: #{model_forward.1} parent=11 // pred_fallthru
        _
      // Predicated region
      $region17: #{model_forward.1} parent=11 // pred_check
        %p187 = pneg %p80
      $region18: #{model_forward.1} parent=11 // pred_check_branch
        %189 = sbr.rel (%p187) target = $region20
      $region19: #{model_forward.1} parent=11 // pred_region
        _
      $region20: #{model_forward.1} parent=11 // pred_fallthru
        _
      // Predicated region
      $region21: #{model_forward.1} parent=11 // pred_check
        %p190 = pneg %p101
      $region22: #{model_forward.1} parent=11 // pred_check_branch
        %192 = sbr.rel (%p190) target = $region24
      $region23: #{model_forward.1} parent=11 // pred_region
        _
      $region24: #{model_forward.1} parent=11 // pred_fallthru
        _
      // Predicated region
      $region25: #{model_forward.1} parent=11 // pred_check
        %p193 = pneg %p122
      $region26: #{model_forward.1} parent=11 // pred_check_branch
        %195 = sbr.rel (%p193) target = $region28
      $region27: #{model_forward.1} parent=11 // pred_region
        _
      $region28: #{model_forward.1} parent=11 // pred_fallthru
        _
      // Predicated region
      $region29: #{model_forward.1} parent=11 // pred_check
        %p196 = pneg %p143
      $region30: #{model_forward.1} parent=11 // pred_check_branch
        %198 = sbr.rel (%p196) target = $region32
      $region31: #{model_forward.1} parent=11 // pred_region
        _
      $region32: #{model_forward.1} parent=11 // pred_fallthru
        _
    $region12: #{model_forward.1} parent=5 // pred_fallthru
      _
    %p199 = scmp.lt.s32.totalorder %s12, 3
    // Predicated region
    $region33: #{model_forward.1} parent=5 // pred_check
      %p200 = pneg %p199
    $region34: #{model_forward.1} parent=5 // pred_check_branch
      %202 = sbr.rel (%p200) target = $region36
    $region35: #{model_forward.1} parent=5 // pred_region
      // Predicated region
      $region37: #{model_forward.1} parent=35 // pred_check
        %p203 = pneg %p32
      $region38: #{model_forward.1} parent=35 // pred_check_branch
        %205 = sbr.rel (%p203) target = $region40
      $region39: #{model_forward.1} parent=35 // pred_region
        %p206 = scmp.lt.s32.totalorder %s12, 2
        %s207 = scalar_select %p206, %s12, 2
        %s208 = smul.addr %s207, 22
        %s209 = smul.addr %s208, 8
        %s210 = scalar_lea.vmem %s0, %s209
      $region40: #{model_forward.1} parent=35 // pred_fallthru
        _
    $region36: #{model_forward.1} parent=5 // pred_fallthru
      _
    %p211 = scmp.le.s32.totalorder 1, %s12
    %p212 = scmp.lt.s32.totalorder %s12, 4
    %p213 = pnand %p211, %p212
    %p214 = pneg %p213
    // Predicated region
    $region41: #{model_forward.1} parent=5 // pred_check
      _
    $region42: #{model_forward.1} parent=5 // pred_check_branch
      %216 = sbr.rel (%p213) target = $region44
    $region43: #{model_forward.1} parent=5 // pred_region
      %s217 = ssub.s32 %s12, 1
      %p218 = scmp.lt.s32.totalorder %s17, 2
      %s219 = scalar_select %p218, %s17, 2
      %s220 = smul.addr %s219, 22
      %s221 = smul.addr %s220, 8
      %s222 = scalar_lea.vmem %s0, %s221
      %p223 = pneg %p38
      %p224 = pneg %p35
      %p225 = pneg %p59
      %p226 = pneg %p56
      %p227 = pneg %p80
      %p228 = pneg %p77
      %p229 = pneg %p101
      %p230 = pneg %p98
      %p231 = pneg %p122
      %p232 = pneg %p119
      %p233 = pneg %p143
      %p234 = pneg %p140
      %p235 = pneg %p169
      %p236 = pneg %p166
      %p237 = scmp.lt.s32.totalorder %s17, 2
      %s238 = scalar_select %p237, %s17, 2
      %s239 = smul.addr %s238, 198
      %s240 = smul.addr %s239, 8
      %s241 = scalar_lea.vmem %s6, %s240
      %p242 = scmp.lt.s32.totalorder %s17, 2
      %s243 = scalar_select %p242, %s17, 2
      %s244 = smul.addr %s243, 22
      %s245 = smul.addr %s244, 8
      %s246 = scalar_lea.vmem %s0, %s245
      %p247 = scmp.lt.s32.totalorder %s17, 2
      %s248 = scalar_select %p247, %s17, 2
      %s249 = smul.addr %s248, 198
      %s250 = smul.addr %s249, 8
      %s251 = scalar_lea.vmem %s6, %s250
      %v252 = vld [vmem:[%s246] sm:$0xff]
      %v253 = vld [vmem:[%s246 + $0x8] sm:$0xff]
      %v254 = vld [vmem:[%s246 + $0x10] sm:$0xff]
      %v255 = vld [vmem:[%s246 + $0x18] sm:$0xff]
      %v256 = vld [vmem:[%s246 + $0x20] sm:$0xff]
      %v257 = vld [vmem:[%s246 + $0x28] sm:$0xff]
      %v258 = vld [vmem:[%s246 + $0x30] sm:$0xff]
      %v259 = vld [vmem:[%s246 + $0x38] sm:$0xff]
      %v260 = vld [vmem:[%s246 + $0x40] sm:$0xff]
      %v261 = vld [vmem:[%s246 + $0x48] sm:$0xff]
      %v262 = vld [vmem:[%s246 + $0x50] sm:$0xff]
      %v263 = vld [vmem:[%s246 + $0x58] sm:$0xff]
      %v264 = vld [vmem:[%s246 + $0x60] sm:$0xff]
      %v265 = vld [vmem:[%s246 + $0x68] sm:$0xff]
      %v266 = vld [vmem:[%s246 + $0x70] sm:$0xff]
      %v267 = vld [vmem:[%s246 + $0x78] sm:$0xff]
      %v268 = vld [vmem:[%s246 + $0x80] sm:$0xff]
      %v269 = vld [vmem:[%s246 + $0x88] sm:$0xff]
      %v270 = vld [vmem:[%s246 + $0x90] sm:$0xff]
      %v271 = vld [vmem:[%s246 + $0x98] sm:$0xff]
      %v272 = vld [vmem:[%s246 + $0xa0] sm:$0xff]
      %v273 = vld [vmem:[%s246 + $0xa8] sm:$0x1]
      %v274 = vld [vmem:[%s1] sm:$0xff]
      %v275 = vld [vmem:[%s1 + $0x8] sm:$0xff]
      %v276 = vld [vmem:[%s1 + $0x10] sm:$0xff]
      %v277 = vld [vmem:[%s1 + $0x18] sm:$0xff]
      %v278 = vld [vmem:[%s1 + $0x20] sm:$0xff]
      %v279 = vld [vmem:[%s1 + $0x28] sm:$0xff]
      %v280 = vld [vmem:[%s1 + $0x30] sm:$0xff]
      %v281 = vld [vmem:[%s1 + $0x38] sm:$0xff]
      %v282 = vld [vmem:[%s1 + $0x40] sm:$0xff]
      %v283 = vld [vmem:[%s1 + $0x48] sm:$0xff]
      %v284 = vld [vmem:[%s1 + $0x50] sm:$0xff]
      %v285 = vld [vmem:[%s1 + $0x58] sm:$0xff]
      %v286 = vld [vmem:[%s1 + $0x60] sm:$0xff]
      %v287 = vld [vmem:[%s1 + $0x68] sm:$0xf]
      %v288 = vld [vmem:[%s2] sm:$0xff]
      %v289 = vld [vmem:[%s2 + $0x8] sm:$0xff]
      %v290 = vld [vmem:[%s2 + $0x10] sm:$0xff]
      %v291 = vld [vmem:[%s2 + $0x18] sm:$0xff]
      %v292 = vld [vmem:[%s2 + $0x20] sm:$0xff]
      %v293 = vld [vmem:[%s2 + $0x28] sm:$0xff]
      %v294 = vld [vmem:[%s2 + $0x30] sm:$0xff]
      %v295 = vld [vmem:[%s2 + $0x38] sm:$0xff]
      %v296 = vld [vmem:[%s2 + $0x40] sm:$0xff]
      %v297 = vld [vmem:[%s2 + $0x48] sm:$0xff]
      %v298 = vld [vmem:[%s2 + $0x50] sm:$0xff]
      %v299 = vld [vmem:[%s2 + $0x58] sm:$0xff]
      %v300 = vld [vmem:[%s2 + $0x60] sm:$0xff]
      %v301 = vld [vmem:[%s2 + $0x68] sm:$0xff]
      %v302 = vld [vmem:[%s2 + $0x70] sm:$0xff]
      %v303 = vld [vmem:[%s2 + $0x78] sm:$0xff]
      %v304 = vld [vmem:[%s2 + $0x80] sm:$0xff]
      %v305 = vld [vmem:[%s2 + $0x88] sm:$0xff]
      %v306 = vld [vmem:[%s2 + $0x90] sm:$0xff]
      %v307 = vld [vmem:[%s2 + $0x98] sm:$0xff]
      %v308 = vld [vmem:[%s2 + $0xa0] sm:$0xff]
      %v309 = vld [vmem:[%s2 + $0xa8] sm:$0x1]
      %vm310 = vcmask 883712
      %v312 = vsel %vm310, %v252, 0
      %v315 = vsel %vm310, %v253, 0
      %v318 = vsel %vm310, %v254, 0
      %v321 = vsel %vm310, %v255, 0
      %v324 = vsel %vm310, %v256, 0
      %v327 = vsel %vm310, %v257, 0
      %v330 = vsel %vm310, %v258, 0
      %v333 = vsel %vm310, %v259, 0
      %v336 = vsel %vm310, %v260, 0
      %v339 = vsel %vm310, %v261, 0
      %v342 = vsel %vm310, %v262, 0
      %v345 = vsel %vm310, %v263, 0
      %v348 = vsel %vm310, %v264, 0
      %v351 = vsel %vm310, %v265, 0
      %v354 = vsel %vm310, %v266, 0
      %v357 = vsel %vm310, %v267, 0
      %v360 = vsel %vm310, %v268, 0
      %v363 = vsel %vm310, %v269, 0
      %v366 = vsel %vm310, %v270, 0
      %v369 = vsel %vm310, %v271, 0
      %v372 = vsel %vm310, %v272, 0
      %v375 = vsel %vm310, %v273, 0
      %vm377 = vcmask 1043456
      %v379 = vsel %vm377, %v287, 0
      %381 = vmatprep.subr.mxu0 0.0
      %382 = vmatpush1.msra.mxu0 0.0
      %383 = vmatprep.subr.mxu0 0.0
      %384 = vmatpush1.msra.mxu0 0.0
      %385 = vmatprep.subr.mxu0 0.0
      %386 = vmatpush1.msra.mxu0 %v379
      %387 = vmatprep.subr.mxu0 0.0
      %388 = vmatpush1.msra.mxu0 %v286
      %389 = vmatprep.subr.mxu0 0.0
      %390 = vmatpush1.msra.mxu0 %v285
      %391 = vmatprep.subr.mxu0 0.0
      %392 = vmatpush1.msra.mxu0 %v284
      %393 = vmatprep.subr.mxu0 0.0
      %394 = vmatpush1.msra.mxu0 %v283
      %395 = vmatprep.subr.mxu0 0.0
      %396 = vmatpush1.msra.mxu0 %v282
      %397 = vmatprep.subr.mxu0 0.0
      %398 = vmatpush1.msra.mxu0 %v281
      %399 = vmatprep.subr.mxu0 0.0
      %400 = vmatpush1.msra.mxu0 %v280
      %401 = vmatprep.subr.mxu0 0.0
      %402 = vmatpush1.msra.mxu0 %v279
      %403 = vmatprep.subr.mxu0 0.0
      %404 = vmatpush1.msra.mxu0 %v278
      %405 = vmatprep.subr.mxu0 0.0
      %406 = vmatpush1.msra.mxu0 %v277
      %407 = vmatprep.subr.mxu0 0.0
      %408 = vmatpush1.msra.mxu0 %v276
      %409 = vmatprep.subr.mxu0 0.0
      %410 = vmatpush1.msra.mxu0 %v275
      %411 = vmatprep.subr.mxu0 0.0
      %412 = vmatpush1.msra.mxu0 %v274
      %413 = vmatprep.subr.mxu0 0.0
      %414 = vmatpush2.msra.mxu0 0.0
      %415 = vmatprep.subr.mxu0 0.0
      %416 = vmatpush2.msra.mxu0 0.0
      %417 = vmatprep.subr.mxu0 0.0
      %418 = vmatpush2.msra.mxu0 0.0
      %419 = vmatprep.subr.mxu0 0.0
      %420 = vmatpush2.msra.mxu0 0.0
      %421 = vmatprep.subr.mxu0 0.0
      %422 = vmatpush2.msra.mxu0 0.0
      %423 = vmatprep.subr.mxu0 0.0
      %424 = vmatpush2.msra.mxu0 0.0
      %425 = vmatprep.subr.mxu0 0.0
      %426 = vmatpush2.msra.mxu0 0.0
      %427 = vmatprep.subr.mxu0 0.0
      %428 = vmatpush2.msra.mxu0 0.0
      %429 = vmatprep.subr.mxu0 0.0
      %430 = vmatpush2.msra.mxu0 0.0
      %431 = vmatprep.subr.mxu0 0.0
      %432 = vmatpush2.msra.mxu0 0.0
      %433 = vmatprep.subr.mxu0 0.0
      %434 = vmatpush2.msra.mxu0 0.0
      %435 = vmatprep.subr.mxu0 0.0
      %436 = vmatpush2.msra.mxu0 0.0
      %437 = vmatprep.subr.mxu0 0.0
      %438 = vmatpush2.msra.mxu0 0.0
      %439 = vmatprep.subr.mxu0 0.0
      %440 = vmatpush2.msra.mxu0 0.0
      %441 = vmatprep.subr.mxu0 0.0
      %442 = vmatpush2.msra.mxu0 0.0
      %443 = vmatprep.subr.mxu0 0.0
      %444 = vmatpush2.msra.mxu0 0.0
      %445 = vmatprep.mubr.f32.mxu0 0.0
      %446 = vmatmul.mubr.f32.gmra.mxu0 %v312
      %v447 = vpop.f32.mrf.mxu0
      %v448 = vadd.f32 %v288, %v447
      %v449 = vpop.f32.mrf.mxu0
      %450 = vmatprep.mubr.f32.mxu0 0.0
      %451 = vmatmul.mubr.f32.gmra.mxu0 %v315
      %v452 = vpop.f32.mrf.mxu0
      %v453 = vadd.f32 %v289, %v452
      %v454 = vpop.f32.mrf.mxu0
      %455 = vmatprep.mubr.f32.mxu0 0.0
      %456 = vmatmul.mubr.f32.gmra.mxu0 %v318
      %v457 = vpop.f32.mrf.mxu0
      %v458 = vadd.f32 %v290, %v457
      %v459 = vpop.f32.mrf.mxu0
      %460 = vmatprep.mubr.f32.mxu0 0.0
      %461 = vmatmul.mubr.f32.gmra.mxu0 %v321
      %v462 = vpop.f32.mrf.mxu0
      %v463 = vadd.f32 %v291, %v462
      %v464 = vpop.f32.mrf.mxu0
      %465 = vmatprep.mubr.f32.mxu0 0.0
      %466 = vmatmul.mubr.f32.gmra.mxu0 %v324
      %v467 = vpop.f32.mrf.mxu0
      %v468 = vadd.f32 %v292, %v467
      %v469 = vpop.f32.mrf.mxu0
      %470 = vmatprep.mubr.f32.mxu0 0.0
      %471 = vmatmul.mubr.f32.gmra.mxu0 %v327
      %v472 = vpop.f32.mrf.mxu0
      %v473 = vadd.f32 %v293, %v472
      %v474 = vpop.f32.mrf.mxu0
      %475 = vmatprep.mubr.f32.mxu0 0.0
      %476 = vmatmul.mubr.f32.gmra.mxu0 %v330
      %v477 = vpop.f32.mrf.mxu0
      %v478 = vadd.f32 %v294, %v477
      %v479 = vpop.f32.mrf.mxu0
      %480 = vmatprep.mubr.f32.mxu0 0.0
      %481 = vmatmul.mubr.f32.gmra.mxu0 %v333
      %v482 = vpop.f32.mrf.mxu0
      %v483 = vadd.f32 %v295, %v482
      %v484 = vpop.f32.mrf.mxu0
      %485 = vmatprep.mubr.f32.mxu0 0.0
      %486 = vmatmul.mubr.f32.gmra.mxu0 %v336
      %v487 = vpop.f32.mrf.mxu0
      %v488 = vadd.f32 %v296, %v487
      %v489 = vpop.f32.mrf.mxu0
      %490 = vmatprep.mubr.f32.mxu0 0.0
      %491 = vmatmul.mubr.f32.gmra.mxu0 %v339
      %v492 = vpop.f32.mrf.mxu0
      %v493 = vadd.f32 %v297, %v492
      %v494 = vpop.f32.mrf.mxu0
      %495 = vmatprep.mubr.f32.mxu0 0.0
      %496 = vmatmul.mubr.f32.gmra.mxu0 %v342
      %v497 = vpop.f32.mrf.mxu0
      %v498 = vadd.f32 %v298, %v497
      %v499 = vpop.f32.mrf.mxu0
      %500 = vmatprep.mubr.f32.mxu0 0.0
      %501 = vmatmul.mubr.f32.gmra.mxu0 %v345
      %v502 = vpop.f32.mrf.mxu0
      %v503 = vadd.f32 %v299, %v502
      %v504 = vpop.f32.mrf.mxu0
      %505 = vmatprep.mubr.f32.mxu0 0.0
      %506 = vmatmul.mubr.f32.gmra.mxu0 %v348
      %v507 = vpop.f32.mrf.mxu0
      %v508 = vadd.f32 %v300, %v507
      %v509 = vpop.f32.mrf.mxu0
      %510 = vmatprep.mubr.f32.mxu0 0.0
      %511 = vmatmul.mubr.f32.gmra.mxu0 %v351
      %v512 = vpop.f32.mrf.mxu0
      %v513 = vadd.f32 %v301, %v512
      %v514 = vpop.f32.mrf.mxu0
      %515 = vmatprep.mubr.f32.mxu0 0.0
      %516 = vmatmul.mubr.f32.gmra.mxu0 %v354
      %v517 = vpop.f32.mrf.mxu0
      %v518 = vadd.f32 %v302, %v517
      %v519 = vpop.f32.mrf.mxu0
      %520 = vmatprep.mubr.f32.mxu0 0.0
      %521 = vmatmul.mubr.f32.gmra.mxu0 %v357
      %v522 = vpop.f32.mrf.mxu0
      %v523 = vadd.f32 %v303, %v522
      %v524 = vpop.f32.mrf.mxu0
      %525 = vmatprep.mubr.f32.mxu0 0.0
      %526 = vmatmul.mubr.f32.gmra.mxu0 %v360
      %v527 = vpop.f32.mrf.mxu0
      %v528 = vadd.f32 %v304, %v527
      %v529 = vpop.f32.mrf.mxu0
      %530 = vmatprep.mubr.f32.mxu0 0.0
      %531 = vmatmul.mubr.f32.gmra.mxu0 %v363
      %v532 = vpop.f32.mrf.mxu0
      %v533 = vadd.f32 %v305, %v532
      %v534 = vpop.f32.mrf.mxu0
      %535 = vmatprep.mubr.f32.mxu0 0.0
      %536 = vmatmul.mubr.f32.gmra.mxu0 %v366
      %v537 = vpop.f32.mrf.mxu0
      %v538 = vadd.f32 %v306, %v537
      %v539 = vpop.f32.mrf.mxu0
      %540 = vmatprep.mubr.f32.mxu0 0.0
      %541 = vmatmul.mubr.f32.gmra.mxu0 %v369
      %v542 = vpop.f32.mrf.mxu0
      %v543 = vadd.f32 %v307, %v542
      %v544 = vpop.f32.mrf.mxu0
      %545 = vmatprep.mubr.f32.mxu0 0.0
      %546 = vmatmul.mubr.f32.gmra.mxu0 %v372
      %v547 = vpop.f32.mrf.mxu0
      %v548 = vadd.f32 %v308, %v547
      %v549 = vpop.f32.mrf.mxu0
      %550 = vmatprep.mubr.f32.mxu0 0.0
      %551 = vmatmul.mubr.f32.gmra.mxu0 %v375
      %v552 = vpop.f32.mrf.mxu0
      %v553 = vadd.f32 %v309, %v552
      %v554 = vpop.f32.mrf.mxu0
      %555 = vdwg.mxu0
      %v556 = vld [vmem:[%s3] sm:$0xff]
      %v557 = vld [vmem:[%s3 + $0x8] sm:$0xff]
      %v558 = vld [vmem:[%s3 + $0x10] sm:$0xff]
      %v559 = vld [vmem:[%s3 + $0x18] sm:$0xff]
      %v560 = vld [vmem:[%s3 + $0x20] sm:$0xff]
      %v561 = vld [vmem:[%s3 + $0x28] sm:$0xff]
      %v562 = vld [vmem:[%s3 + $0x30] sm:$0xff]
      %v563 = vld [vmem:[%s3 + $0x38] sm:$0xff]
      %v564 = vld [vmem:[%s3 + $0x40] sm:$0xff]
      %v565 = vld [vmem:[%s3 + $0x48] sm:$0xff]
      %v566 = vld [vmem:[%s3 + $0x50] sm:$0xff]
      %v567 = vld [vmem:[%s3 + $0x58] sm:$0xff]
      %v568 = vld [vmem:[%s3 + $0x60] sm:$0xff]
      %v569 = vld [vmem:[%s3 + $0x68] sm:$0xff]
      %v570 = vld [vmem:[%s3 + $0x70] sm:$0xff]
      %v571 = vld [vmem:[%s3 + $0x78] sm:$0xff]
      %v572 = vld [vmem:[%s3 + $0x80] sm:$0xff]
      %v573 = vld [vmem:[%s3 + $0x88] sm:$0xff]
      %v574 = vld [vmem:[%s3 + $0x90] sm:$0xff]
      %v575 = vld [vmem:[%s3 + $0x98] sm:$0xff]
      %v576 = vld [vmem:[%s3 + $0xa0] sm:$0xff]
      %v577 = vld [vmem:[%s3 + $0xa8] sm:$0xff]
      %v578 = vld [vmem:[%s3 + $0xb0] sm:$0xff]
      %v579 = vld [vmem:[%s3 + $0xb8] sm:$0xff]
      %v580 = vld [vmem:[%s3 + $0xc0] sm:$0xff]
      %v581 = vld [vmem:[%s3 + $0xc8] sm:$0xff]
      %v582 = vld [vmem:[%s3 + $0xd0] sm:$0xff]
      %v583 = vld [vmem:[%s3 + $0xd8] sm:$0xff]
      %v584 = vld [vmem:[%s3 + $0xe0] sm:$0xff]
      %v585 = vld [vmem:[%s3 + $0xe8] sm:$0xff]
      %v586 = vld [vmem:[%s3 + $0xf0] sm:$0xff]
      %v587 = vld [vmem:[%s3 + $0xf8] sm:$0xff]
      %v588 = vld [vmem:[%s4] sm:$0xf]
      %v590 = vlaneseq
      %v591 = vshrl.u32 %v590, 7
      %v592 = vsub.s32 0, %v591
      %v593 = vrot.slane %v588, %v592
      %v594 = vlaneseq
      %v595 = vshrl.u32 %v594, 7
      %v596 = vsub.s32 1, %v595
      %v597 = vrot.slane %v588, %v596
      %v598 = vlaneseq
      %v599 = vshrl.u32 %v598, 7
      %v600 = vsub.s32 2, %v599
      %v601 = vrot.slane %v588, %v600
      %v602 = vlaneseq
      %v603 = vshrl.u32 %v602, 7
      %v604 = vsub.s32 3, %v603
      %v605 = vrot.slane %v588, %v604
      %vm610 = vcmask 523264
      %v612 = vsel %vm610, %v448, 0
      %v615 = vsel %vm610, %v453, 0
      %v618 = vsel %vm610, %v458, 0
      %v621 = vsel %vm610, %v463, 0
      %v624 = vsel %vm610, %v468, 0
      %v627 = vsel %vm610, %v473, 0
      %v630 = vsel %vm610, %v478, 0
      %v633 = vsel %vm610, %v483, 0
      %v636 = vsel %vm610, %v488, 0
      %v639 = vsel %vm610, %v493, 0
      %v642 = vsel %vm610, %v498, 0
      %v645 = vsel %vm610, %v503, 0
      %v648 = vsel %vm610, %v508, 0
      %v651 = vsel %vm610, %v513, 0
      %v654 = vsel %vm610, %v518, 0
      %v657 = vsel %vm610, %v523, 0
      %v660 = vsel %vm610, %v528, 0
      %v663 = vsel %vm610, %v533, 0
      %v666 = vsel %vm610, %v538, 0
      %v669 = vsel %vm610, %v543, 0
      %v672 = vsel %vm610, %v548, 0
      %v675 = vsel %vm610, %v553, 0
      %677 = vmatprep.subr.mxu0 0.0
      %678 = vmatpush1.msra.mxu0 0.0
      %679 = vmatprep.subr.mxu0 0.0
      %680 = vmatpush1.msra.mxu0 0.0
      %681 = vmatprep.subr.mxu0 0.0
      %682 = vmatpush1.msra.mxu0 0.0
      %683 = vmatprep.subr.mxu0 0.0
      %684 = vmatpush1.msra.mxu0 0.0
      %685 = vmatprep.subr.mxu0 0.0
      %686 = vmatpush1.msra.mxu0 0.0
      %687 = vmatprep.subr.mxu0 0.0
      %688 = vmatpush1.msra.mxu0 0.0
      %689 = vmatprep.subr.mxu0 0.0
      %690 = vmatpush1.msra.mxu0 0.0
      %691 = vmatprep.subr.mxu0 0.0
      %692 = vmatpush1.msra.mxu0 0.0
      %693 = vmatprep.subr.mxu0 %v585
      %694 = vmatpush1.msra.mxu0 %v584
      %695 = vmatprep.subr.mxu0 %v581
      %696 = vmatpush1.msra.mxu0 %v580
      %697 = vmatprep.subr.mxu0 %v577
      %698 = vmatpush1.msra.mxu0 %v576
      %699 = vmatprep.subr.mxu0 %v573
      %700 = vmatpush1.msra.mxu0 %v572
      %701 = vmatprep.subr.mxu0 %v569
      %702 = vmatpush1.msra.mxu0 %v568
      %703 = vmatprep.subr.mxu0 %v565
      %704 = vmatpush1.msra.mxu0 %v564
      %705 = vmatprep.subr.mxu0 %v561
      %706 = vmatpush1.msra.mxu0 %v560
      %707 = vmatprep.subr.mxu0 %v557
      %708 = vmatpush1.msra.mxu0 %v556
      %709 = vmatprep.subr.mxu0 0.0
      %710 = vmatpush2.msra.mxu0 0.0
      %711 = vmatprep.subr.mxu0 0.0
      %712 = vmatpush2.msra.mxu0 0.0
      %713 = vmatprep.subr.mxu0 0.0
      %714 = vmatpush2.msra.mxu0 0.0
      %715 = vmatprep.subr.mxu0 0.0
      %716 = vmatpush2.msra.mxu0 0.0
      %717 = vmatprep.subr.mxu0 0.0
      %718 = vmatpush2.msra.mxu0 0.0
      %719 = vmatprep.subr.mxu0 0.0
      %720 = vmatpush2.msra.mxu0 0.0
      %721 = vmatprep.subr.mxu0 0.0
      %722 = vmatpush2.msra.mxu0 0.0
      %723 = vmatprep.subr.mxu0 0.0
      %724 = vmatpush2.msra.mxu0 0.0
      %725 = vmatprep.subr.mxu0 0.0
      %726 = vmatpush2.msra.mxu0 0.0
      %727 = vmatprep.subr.mxu0 0.0
      %728 = vmatpush2.msra.mxu0 0.0
      %729 = vmatprep.subr.mxu0 0.0
      %730 = vmatpush2.msra.mxu0 0.0
      %731 = vmatprep.subr.mxu0 0.0
      %732 = vmatpush2.msra.mxu0 0.0
      %733 = vmatprep.subr.mxu0 0.0
      %734 = vmatpush2.msra.mxu0 0.0
      %735 = vmatprep.subr.mxu0 0.0
      %736 = vmatpush2.msra.mxu0 0.0
      %737 = vmatprep.subr.mxu0 0.0
      %738 = vmatpush2.msra.mxu0 0.0
      %739 = vmatprep.subr.mxu0 0.0
      %740 = vmatpush2.msra.mxu0 0.0
      %741 = vmatprep.mubr.f32.mxu0 0.0
      %742 = vmatmul.mubr.f32.gmra.mxu0 %v612
      %v743 = vpop.f32.mrf.mxu0
      %v744 = vadd.f32 %v593, %v743
      %v745 = vpop.f32.mrf.mxu0
      %v746 = vadd.f32 %v597, %v745
      %747 = vmatprep.mubr.f32.mxu0 0.0
      %748 = vmatmul.mubr.f32.gmra.mxu0 %v615
      %v749 = vpop.f32.mrf.mxu0
      %v750 = vadd.f32 %v593, %v749
      %v751 = vpop.f32.mrf.mxu0
      %v752 = vadd.f32 %v597, %v751
      %753 = vmatprep.mubr.f32.mxu0 0.0
      %754 = vmatmul.mubr.f32.gmra.mxu0 %v618
      %v755 = vpop.f32.mrf.mxu0
      %v756 = vadd.f32 %v593, %v755
      %v757 = vpop.f32.mrf.mxu0
      %v758 = vadd.f32 %v597, %v757
      %759 = vmatprep.mubr.f32.mxu0 0.0
      %760 = vmatmul.mubr.f32.gmra.mxu0 %v621
      %v761 = vpop.f32.mrf.mxu0
      %v762 = vadd.f32 %v593, %v761
      %v763 = vpop.f32.mrf.mxu0
      %v764 = vadd.f32 %v597, %v763
      %765 = vmatprep.mubr.f32.mxu0 0.0
      %766 = vmatmul.mubr.f32.gmra.mxu0 %v624
      %v767 = vpop.f32.mrf.mxu0
      %v768 = vadd.f32 %v593, %v767
      %v769 = vpop.f32.mrf.mxu0
      %v770 = vadd.f32 %v597, %v769
      %771 = vmatprep.mubr.f32.mxu0 0.0
      %772 = vmatmul.mubr.f32.gmra.mxu0 %v627
      %v773 = vpop.f32.mrf.mxu0
      %v774 = vadd.f32 %v593, %v773
      %v775 = vpop.f32.mrf.mxu0
      %v776 = vadd.f32 %v597, %v775
      %777 = vmatprep.mubr.f32.mxu0 0.0
      %778 = vmatmul.mubr.f32.gmra.mxu0 %v630
      %v779 = vpop.f32.mrf.mxu0
      %v780 = vadd.f32 %v593, %v779
      %v781 = vpop.f32.mrf.mxu0
      %v782 = vadd.f32 %v597, %v781
      %783 = vmatprep.mubr.f32.mxu0 0.0
      %784 = vmatmul.mubr.f32.gmra.mxu0 %v633
      %v785 = vpop.f32.mrf.mxu0
      %v786 = vadd.f32 %v593, %v785
      %v787 = vpop.f32.mrf.mxu0
      %v788 = vadd.f32 %v597, %v787
      %789 = vmatprep.mubr.f32.mxu0 0.0
      %790 = vmatmul.mubr.f32.gmra.mxu0 %v636
      %v791 = vpop.f32.mrf.mxu0
      %v792 = vadd.f32 %v593, %v791
      %v793 = vpop.f32.mrf.mxu0
      %v794 = vadd.f32 %v597, %v793
      %795 = vmatprep.mubr.f32.mxu0 0.0
      %796 = vmatmul.mubr.f32.gmra.mxu0 %v639
      %v797 = vpop.f32.mrf.mxu0
      %v798 = vadd.f32 %v593, %v797
      %v799 = vpop.f32.mrf.mxu0
      %v800 = vadd.f32 %v597, %v799
      %801 = vmatprep.mubr.f32.mxu0 0.0
      %802 = vmatmul.mubr.f32.gmra.mxu0 %v642
      %v803 = vpop.f32.mrf.mxu0
      %v804 = vadd.f32 %v593, %v803
      %v805 = vpop.f32.mrf.mxu0
      %v806 = vadd.f32 %v597, %v805
      %807 = vmatprep.mubr.f32.mxu0 0.0
      %808 = vmatmul.mubr.f32.gmra.mxu0 %v645
      %v809 = vpop.f32.mrf.mxu0
      %v810 = vadd.f32 %v593, %v809
      %v811 = vpop.f32.mrf.mxu0
      %v812 = vadd.f32 %v597, %v811
      %813 = vmatprep.mubr.f32.mxu0 0.0
      %814 = vmatmul.mubr.f32.gmra.mxu0 %v648
      %v815 = vpop.f32.mrf.mxu0
      %v816 = vadd.f32 %v593, %v815
      %v817 = vpop.f32.mrf.mxu0
      %v818 = vadd.f32 %v597, %v817
      %819 = vmatprep.mubr.f32.mxu0 0.0
      %820 = vmatmul.mubr.f32.gmra.mxu0 %v651
      %v821 = vpop.f32.mrf.mxu0
      %v822 = vadd.f32 %v593, %v821
      %v823 = vpop.f32.mrf.mxu0
      %v824 = vadd.f32 %v597, %v823
      %825 = vmatprep.mubr.f32.mxu0 0.0
      %826 = vmatmul.mubr.f32.gmra.mxu0 %v654
      %v827 = vpop.f32.mrf.mxu0
      %v828 = vadd.f32 %v593, %v827
      %v829 = vpop.f32.mrf.mxu0
      %v830 = vadd.f32 %v597, %v829
      %831 = vmatprep.mubr.f32.mxu0 0.0
      %832 = vmatmul.mubr.f32.gmra.mxu0 %v657
      %v833 = vpop.f32.mrf.mxu0
      %v834 = vadd.f32 %v593, %v833
      %v835 = vpop.f32.mrf.mxu0
      %v836 = vadd.f32 %v597, %v835
      %837 = vmatprep.mubr.f32.mxu0 0.0
      %838 = vmatmul.mubr.f32.gmra.mxu0 %v660
      %v839 = vpop.f32.mrf.mxu0
      %v840 = vadd.f32 %v593, %v839
      %v841 = vpop.f32.mrf.mxu0
      %v842 = vadd.f32 %v597, %v841
      %843 = vmatprep.mubr.f32.mxu0 0.0
      %844 = vmatmul.mubr.f32.gmra.mxu0 %v663
      %v845 = vpop.f32.mrf.mxu0
      %v846 = vadd.f32 %v593, %v845
      %v847 = vpop.f32.mrf.mxu0
      %v848 = vadd.f32 %v597, %v847
      %849 = vmatprep.mubr.f32.mxu0 0.0
      %850 = vmatmul.mubr.f32.gmra.mxu0 %v666
      %v851 = vpop.f32.mrf.mxu0
      %v852 = vadd.f32 %v593, %v851
      %v853 = vpop.f32.mrf.mxu0
      %v854 = vadd.f32 %v597, %v853
      %855 = vmatprep.mubr.f32.mxu0 0.0
      %856 = vmatmul.mubr.f32.gmra.mxu0 %v669
      %v857 = vpop.f32.mrf.mxu0
      %v858 = vadd.f32 %v593, %v857
      %v859 = vpop.f32.mrf.mxu0
      %v860 = vadd.f32 %v597, %v859
      %861 = vmatprep.mubr.f32.mxu0 0.0
      %862 = vmatmul.mubr.f32.gmra.mxu0 %v672
      %v863 = vpop.f32.mrf.mxu0
      %v864 = vadd.f32 %v593, %v863
      %v865 = vpop.f32.mrf.mxu0
      %v866 = vadd.f32 %v597, %v865
      %867 = vmatprep.mubr.f32.mxu0 0.0
      %868 = vmatmul.mubr.f32.gmra.mxu0 %v675
      %v869 = vpop.f32.mrf.mxu0
      %v870 = vadd.f32 %v593, %v869
      %v871 = vpop.f32.mrf.mxu0
      %v872 = vadd.f32 %v597, %v871
      %873 = vdwg.mxu0
      %874 = vmatprep.subr.mxu0 0.0
      %875 = vmatpush1.msra.mxu0 0.0
      %876 = vmatprep.subr.mxu0 0.0
      %877 = vmatpush1.msra.mxu0 0.0
      %878 = vmatprep.subr.mxu0 0.0
      %879 = vmatpush1.msra.mxu0 0.0
      %880 = vmatprep.subr.mxu0 0.0
      %881 = vmatpush1.msra.mxu0 0.0
      %882 = vmatprep.subr.mxu0 0.0
      %883 = vmatpush1.msra.mxu0 0.0
      %884 = vmatprep.subr.mxu0 0.0
      %885 = vmatpush1.msra.mxu0 0.0
      %886 = vmatprep.subr.mxu0 0.0
      %887 = vmatpush1.msra.mxu0 0.0
      %888 = vmatprep.subr.mxu0 0.0
      %889 = vmatpush1.msra.mxu0 0.0
      %890 = vmatprep.subr.mxu0 %v587
      %891 = vmatpush1.msra.mxu0 %v586
      %892 = vmatprep.subr.mxu0 %v583
      %893 = vmatpush1.msra.mxu0 %v582
      %894 = vmatprep.subr.mxu0 %v579
      %895 = vmatpush1.msra.mxu0 %v578
      %896 = vmatprep.subr.mxu0 %v575
      %897 = vmatpush1.msra.mxu0 %v574
      %898 = vmatprep.subr.mxu0 %v571
      %899 = vmatpush1.msra.mxu0 %v570
      %900 = vmatprep.subr.mxu0 %v567
      %901 = vmatpush1.msra.mxu0 %v566
      %902 = vmatprep.subr.mxu0 %v563
      %903 = vmatpush1.msra.mxu0 %v562
      %904 = vmatprep.subr.mxu0 %v559
      %905 = vmatpush1.msra.mxu0 %v558
      %906 = vmatprep.subr.mxu0 0.0
      %907 = vmatpush2.msra.mxu0 0.0
      %908 = vmatprep.subr.mxu0 0.0
      %909 = vmatpush2.msra.mxu0 0.0
      %910 = vmatprep.subr.mxu0 0.0
      %911 = vmatpush2.msra.mxu0 0.0
      %912 = vmatprep.subr.mxu0 0.0
      %913 = vmatpush2.msra.mxu0 0.0
      %914 = vmatprep.subr.mxu0 0.0
      %915 = vmatpush2.msra.mxu0 0.0
      %916 = vmatprep.subr.mxu0 0.0
      %917 = vmatpush2.msra.mxu0 0.0
      %918 = vmatprep.subr.mxu0 0.0
      %919 = vmatpush2.msra.mxu0 0.0
      %920 = vmatprep.subr.mxu0 0.0
      %921 = vmatpush2.msra.mxu0 0.0
      %922 = vmatprep.subr.mxu0 0.0
      %923 = vmatpush2.msra.mxu0 0.0
      %924 = vmatprep.subr.mxu0 0.0
      %925 = vmatpush2.msra.mxu0 0.0
      %926 = vmatprep.subr.mxu0 0.0
      %927 = vmatpush2.msra.mxu0 0.0
      %928 = vmatprep.subr.mxu0 0.0
      %929 = vmatpush2.msra.mxu0 0.0
      %930 = vmatprep.subr.mxu0 0.0
      %931 = vmatpush2.msra.mxu0 0.0
      %932 = vmatprep.subr.mxu0 0.0
      %933 = vmatpush2.msra.mxu0 0.0
      %934 = vmatprep.subr.mxu0 0.0
      %935 = vmatpush2.msra.mxu0 0.0
      %936 = vmatprep.subr.mxu0 0.0
      %937 = vmatpush2.msra.mxu0 0.0
      %938 = vmatprep.mubr.f32.mxu0 0.0
      %939 = vmatmul.mubr.f32.gmra.mxu0 %v612
      %v940 = vpop.f32.mrf.mxu0
      %v941 = vadd.f32 %v601, %v940
      %v942 = vpop.f32.mrf.mxu0
      %v943 = vadd.f32 %v605, %v942
      %944 = vmatprep.mubr.f32.mxu0 0.0
      %945 = vmatmul.mubr.f32.gmra.mxu0 %v615
      %v946 = vpop.f32.mrf.mxu0
      %v947 = vadd.f32 %v601, %v946
      %v948 = vpop.f32.mrf.mxu0
      %v949 = vadd.f32 %v605, %v948
      %950 = vmatprep.mubr.f32.mxu0 0.0
      %951 = vmatmul.mubr.f32.gmra.mxu0 %v618
      %v952 = vpop.f32.mrf.mxu0
      %v953 = vadd.f32 %v601, %v952
      %v954 = vpop.f32.mrf.mxu0
      %v955 = vadd.f32 %v605, %v954
      %956 = vmatprep.mubr.f32.mxu0 0.0
      %957 = vmatmul.mubr.f32.gmra.mxu0 %v621
      %v958 = vpop.f32.mrf.mxu0
      %v959 = vadd.f32 %v601, %v958
      %v960 = vpop.f32.mrf.mxu0
      %v961 = vadd.f32 %v605, %v960
      %962 = vmatprep.mubr.f32.mxu0 0.0
      %963 = vmatmul.mubr.f32.gmra.mxu0 %v624
      %v964 = vpop.f32.mrf.mxu0
      %v965 = vadd.f32 %v601, %v964
      %v966 = vpop.f32.mrf.mxu0
      %v967 = vadd.f32 %v605, %v966
      %968 = vmatprep.mubr.f32.mxu0 0.0
      %969 = vmatmul.mubr.f32.gmra.mxu0 %v627
      %v970 = vpop.f32.mrf.mxu0
      %v971 = vadd.f32 %v601, %v970
      %v972 = vpop.f32.mrf.mxu0
      %v973 = vadd.f32 %v605, %v972
      %974 = vmatprep.mubr.f32.mxu0 0.0
      %975 = vmatmul.mubr.f32.gmra.mxu0 %v630
      %v976 = vpop.f32.mrf.mxu0
      %v977 = vadd.f32 %v601, %v976
      %v978 = vpop.f32.mrf.mxu0
      %v979 = vadd.f32 %v605, %v978
      %980 = vmatprep.mubr.f32.mxu0 0.0
      %981 = vmatmul.mubr.f32.gmra.mxu0 %v633
      %v982 = vpop.f32.mrf.mxu0
      %v983 = vadd.f32 %v601, %v982
      %v984 = vpop.f32.mrf.mxu0
      %v985 = vadd.f32 %v605, %v984
      %986 = vmatprep.mubr.f32.mxu0 0.0
      %987 = vmatmul.mubr.f32.gmra.mxu0 %v636
      %v988 = vpop.f32.mrf.mxu0
      %v989 = vadd.f32 %v601, %v988
      %v990 = vpop.f32.mrf.mxu0
      %v991 = vadd.f32 %v605, %v990
      %992 = vmatprep.mubr.f32.mxu0 0.0
      %993 = vmatmul.mubr.f32.gmra.mxu0 %v639
      %v994 = vpop.f32.mrf.mxu0
      %v995 = vadd.f32 %v601, %v994
      %v996 = vpop.f32.mrf.mxu0
      %v997 = vadd.f32 %v605, %v996
      %998 = vmatprep.mubr.f32.mxu0 0.0
      %999 = vmatmul.mubr.f32.gmra.mxu0 %v642
      %v1000 = vpop.f32.mrf.mxu0
      %v1001 = vadd.f32 %v601, %v1000
      %v1002 = vpop.f32.mrf.mxu0
      %v1003 = vadd.f32 %v605, %v1002
      %1004 = vmatprep.mubr.f32.mxu0 0.0
      %1005 = vmatmul.mubr.f32.gmra.mxu0 %v645
      %v1006 = vpop.f32.mrf.mxu0
      %v1007 = vadd.f32 %v601, %v1006
      %v1008 = vpop.f32.mrf.mxu0
      %v1009 = vadd.f32 %v605, %v1008
      %1010 = vmatprep.mubr.f32.mxu0 0.0
      %1011 = vmatmul.mubr.f32.gmra.mxu0 %v648
      %v1012 = vpop.f32.mrf.mxu0
      %v1013 = vadd.f32 %v601, %v1012
      %v1014 = vpop.f32.mrf.mxu0
      %v1015 = vadd.f32 %v605, %v1014
      %1016 = vmatprep.mubr.f32.mxu0 0.0
      %1017 = vmatmul.mubr.f32.gmra.mxu0 %v651
      %v1018 = vpop.f32.mrf.mxu0
      %v1019 = vadd.f32 %v601, %v1018
      %v1020 = vpop.f32.mrf.mxu0
      %v1021 = vadd.f32 %v605, %v1020
      %1022 = vmatprep.mubr.f32.mxu0 0.0
      %1023 = vmatmul.mubr.f32.gmra.mxu0 %v654
      %v1024 = vpop.f32.mrf.mxu0
      %v1025 = vadd.f32 %v601, %v1024
      %v1026 = vpop.f32.mrf.mxu0
      %v1027 = vadd.f32 %v605, %v1026
      %1028 = vmatprep.mubr.f32.mxu0 0.0
      %1029 = vmatmul.mubr.f32.gmra.mxu0 %v657
      %v1030 = vpop.f32.mrf.mxu0
      %v1031 = vadd.f32 %v601, %v1030
      %v1032 = vpop.f32.mrf.mxu0
      %v1033 = vadd.f32 %v605, %v1032
      %1034 = vmatprep.mubr.f32.mxu0 0.0
      %1035 = vmatmul.mubr.f32.gmra.mxu0 %v660
      %v1036 = vpop.f32.mrf.mxu0
      %v1037 = vadd.f32 %v601, %v1036
      %v1038 = vpop.f32.mrf.mxu0
      %v1039 = vadd.f32 %v605, %v1038
      %1040 = vmatprep.mubr.f32.mxu0 0.0
      %1041 = vmatmul.mubr.f32.gmra.mxu0 %v663
      %v1042 = vpop.f32.mrf.mxu0
      %v1043 = vadd.f32 %v601, %v1042
      %v1044 = vpop.f32.mrf.mxu0
      %v1045 = vadd.f32 %v605, %v1044
      %1046 = vmatprep.mubr.f32.mxu0 0.0
      %1047 = vmatmul.mubr.f32.gmra.mxu0 %v666
      %v1048 = vpop.f32.mrf.mxu0
      %v1049 = vadd.f32 %v601, %v1048
      %v1050 = vpop.f32.mrf.mxu0
      %v1051 = vadd.f32 %v605, %v1050
      %1052 = vmatprep.mubr.f32.mxu0 0.0
      %1053 = vmatmul.mubr.f32.gmra.mxu0 %v669
      %v1054 = vpop.f32.mrf.mxu0
      %v1055 = vadd.f32 %v601, %v1054
      %v1056 = vpop.f32.mrf.mxu0
      %v1057 = vadd.f32 %v605, %v1056
      %1058 = vmatprep.mubr.f32.mxu0 0.0
      %1059 = vmatmul.mubr.f32.gmra.mxu0 %v672
      %v1060 = vpop.f32.mrf.mxu0
      %v1061 = vadd.f32 %v601, %v1060
      %v1062 = vpop.f32.mrf.mxu0
      %v1063 = vadd.f32 %v605, %v1062
      %1064 = vmatprep.mubr.f32.mxu0 0.0
      %1065 = vmatmul.mubr.f32.gmra.mxu0 %v675
      %v1066 = vpop.f32.mrf.mxu0
      %v1067 = vadd.f32 %v601, %v1066
      %v1068 = vpop.f32.mrf.mxu0
      %v1069 = vadd.f32 %v605, %v1068
      %1070 = vdwg.mxu0
      %v1071 = vxor.u32 %v744, 2147483648
      %v1072 = vxor.u32 %v746, 2147483648
      %v1073 = vxor.u32 %v941, 2147483648
      %v1074 = vxor.u32 %v943, 2147483648
      %v1075 = vxor.u32 %v750, 2147483648
      %v1076 = vxor.u32 %v752, 2147483648
      %v1077 = vxor.u32 %v947, 2147483648
      %v1078 = vxor.u32 %v949, 2147483648
      %v1079 = vxor.u32 %v756, 2147483648
      %v1080 = vxor.u32 %v758, 2147483648
      %v1081 = vxor.u32 %v953, 2147483648
      %v1082 = vxor.u32 %v955, 2147483648
      %v1083 = vxor.u32 %v762, 2147483648
      %v1084 = vxor.u32 %v764, 2147483648
      %v1085 = vxor.u32 %v959, 2147483648
      %v1086 = vxor.u32 %v961, 2147483648
      %v1087 = vxor.u32 %v768, 2147483648
      %v1088 = vxor.u32 %v770, 2147483648
      %v1089 = vxor.u32 %v965, 2147483648
      %v1090 = vxor.u32 %v967, 2147483648
      %v1091 = vxor.u32 %v774, 2147483648
      %v1092 = vxor.u32 %v776, 2147483648
      %v1093 = vxor.u32 %v971, 2147483648
      %v1094 = vxor.u32 %v973, 2147483648
      %v1095 = vxor.u32 %v780, 2147483648
      %v1096 = vxor.u32 %v782, 2147483648
      %v1097 = vxor.u32 %v977, 2147483648
      %v1098 = vxor.u32 %v979, 2147483648
      %v1099 = vxor.u32 %v786, 2147483648
      %v1100 = vxor.u32 %v788, 2147483648
      %v1101 = vxor.u32 %v983, 2147483648
      %v1102 = vxor.u32 %v985, 2147483648
      %v1103 = vxor.u32 %v792, 2147483648
      %v1104 = vxor.u32 %v794, 2147483648
      %v1105 = vxor.u32 %v989, 2147483648
      %v1106 = vxor.u32 %v991, 2147483648
      %v1107 = vxor.u32 %v798, 2147483648
      %v1108 = vxor.u32 %v800, 2147483648
      %v1109 = vxor.u32 %v995, 2147483648
      %v1110 = vxor.u32 %v997, 2147483648
      %v1111 = vxor.u32 %v804, 2147483648
      %v1112 = vxor.u32 %v806, 2147483648
      %v1113 = vxor.u32 %v1001, 2147483648
      %v1114 = vxor.u32 %v1003, 2147483648
      %v1115 = vxor.u32 %v810, 2147483648
      %v1116 = vxor.u32 %v812, 2147483648
      %v1117 = vxor.u32 %v1007, 2147483648
      %v1118 = vxor.u32 %v1009, 2147483648
      %v1119 = vxor.u32 %v816, 2147483648
      %v1120 = vxor.u32 %v818, 2147483648
      %v1121 = vxor.u32 %v1013, 2147483648
      %v1122 = vxor.u32 %v1015, 2147483648
      %v1123 = vxor.u32 %v822, 2147483648
      %v1124 = vxor.u32 %v824, 2147483648
      %v1125 = vxor.u32 %v1019, 2147483648
      %v1126 = vxor.u32 %v1021, 2147483648
      %v1127 = vxor.u32 %v828, 2147483648
      %v1128 = vxor.u32 %v830, 2147483648
      %v1129 = vxor.u32 %v1025, 2147483648
      %v1130 = vxor.u32 %v1027, 2147483648
      %v1131 = vxor.u32 %v834, 2147483648
      %v1132 = vxor.u32 %v836, 2147483648
      %v1133 = vxor.u32 %v1031, 2147483648
      %v1134 = vxor.u32 %v1033, 2147483648
      %v1135 = vxor.u32 %v840, 2147483648
      %v1136 = vxor.u32 %v842, 2147483648
      %v1137 = vxor.u32 %v1037, 2147483648
      %v1138 = vxor.u32 %v1039, 2147483648
      %v1139 = vxor.u32 %v846, 2147483648
      %v1140 = vxor.u32 %v848, 2147483648
      %v1141 = vxor.u32 %v1043, 2147483648
      %v1142 = vxor.u32 %v1045, 2147483648
      %v1143 = vxor.u32 %v852, 2147483648
      %v1144 = vxor.u32 %v854, 2147483648
      %v1145 = vxor.u32 %v1049, 2147483648
      %v1146 = vxor.u32 %v1051, 2147483648
      %v1147 = vxor.u32 %v858, 2147483648
      %v1148 = vxor.u32 %v860, 2147483648
      %v1149 = vxor.u32 %v1055, 2147483648
      %v1150 = vxor.u32 %v1057, 2147483648
      %v1151 = vxor.u32 %v864, 2147483648
      %v1152 = vxor.u32 %v866, 2147483648
      %v1153 = vxor.u32 %v1061, 2147483648
      %v1154 = vxor.u32 %v1063, 2147483648
      %v1155 = vxor.u32 %v870, 2147483648
      %v1156 = vxor.u32 %v872, 2147483648
      %v1157 = vxor.u32 %v1067, 2147483648
      %v1158 = vxor.u32 %v1069, 2147483648
      %v1159 = vmul.f32 %v1071, 1.442695
      %v1160 = vpow.pop %v1159
      %v1161 = vmul.f32 %v1072, 1.442695
      %v1162 = vpow.pop %v1161
      %v1163 = vmul.f32 %v1073, 1.442695
      %v1164 = vpow.pop %v1163
      %v1165 = vmul.f32 %v1074, 1.442695
      %v1166 = vpow.pop %v1165
      %v1167 = vmul.f32 %v1075, 1.442695
      %v1168 = vpow.pop %v1167
      %v1169 = vmul.f32 %v1076, 1.442695
      %v1170 = vpow.pop %v1169
      %v1171 = vmul.f32 %v1077, 1.442695
      %v1172 = vpow.pop %v1171
      %v1173 = vmul.f32 %v1078, 1.442695
      %v1174 = vpow.pop %v1173
      %v1175 = vmul.f32 %v1079, 1.442695
      %v1176 = vpow.pop %v1175
      %v1177 = vmul.f32 %v1080, 1.442695
      %v1178 = vpow.pop %v1177
      %v1179 = vmul.f32 %v1081, 1.442695
      %v1180 = vpow.pop %v1179
      %v1181 = vmul.f32 %v1082, 1.442695
      %v1182 = vpow.pop %v1181
      %v1183 = vmul.f32 %v1083, 1.442695
      %v1184 = vpow.pop %v1183
      %v1185 = vmul.f32 %v1084, 1.442695
      %v1186 = vpow.pop %v1185
      %v1187 = vmul.f32 %v1085, 1.442695
      %v1188 = vpow.pop %v1187
      %v1189 = vmul.f32 %v1086, 1.442695
      %v1190 = vpow.pop %v1189
      %v1191 = vmul.f32 %v1087, 1.442695
      %v1192 = vpow.pop %v1191
      %v1193 = vmul.f32 %v1088, 1.442695
      %v1194 = vpow.pop %v1193
      %v1195 = vmul.f32 %v1089, 1.442695
      %v1196 = vpow.pop %v1195
      %v1197 = vmul.f32 %v1090, 1.442695
      %v1198 = vpow.pop %v1197
      %v1199 = vmul.f32 %v1091, 1.442695
      %v1200 = vpow.pop %v1199
      %v1201 = vmul.f32 %v1092, 1.442695
      %v1202 = vpow.pop %v1201
      %v1203 = vmul.f32 %v1093, 1.442695
      %v1204 = vpow.pop %v1203
      %v1205 = vmul.f32 %v1094, 1.442695
      %v1206 = vpow.pop %v1205
      %v1207 = vmul.f32 %v1095, 1.442695
      %v1208 = vpow.pop %v1207
      %v1209 = vmul.f32 %v1096, 1.442695
      %v1210 = vpow.pop %v1209
      %v1211 = vmul.f32 %v1097, 1.442695
      %v1212 = vpow.pop %v1211
      %v1213 = vmul.f32 %v1098, 1.442695
      %v1214 = vpow.pop %v1213
      %v1215 = vmul.f32 %v1099, 1.442695
      %v1216 = vpow.pop %v1215
      %v1217 = vmul.f32 %v1100, 1.442695
      %v1218 = vpow.pop %v1217
      %v1219 = vmul.f32 %v1101, 1.442695
      %v1220 = vpow.pop %v1219
      %v1221 = vmul.f32 %v1102, 1.442695
      %v1222 = vpow.pop %v1221
      %v1223 = vmul.f32 %v1103, 1.442695
      %v1224 = vpow.pop %v1223
      %v1225 = vmul.f32 %v1104, 1.442695
      %v1226 = vpow.pop %v1225
      %v1227 = vmul.f32 %v1105, 1.442695
      %v1228 = vpow.pop %v1227
      %v1229 = vmul.f32 %v1106, 1.442695
      %v1230 = vpow.pop %v1229
      %v1231 = vmul.f32 %v1107, 1.442695
      %v1232 = vpow.pop %v1231
      %v1233 = vmul.f32 %v1108, 1.442695
      %v1234 = vpow.pop %v1233
      %v1235 = vmul.f32 %v1109, 1.442695
      %v1236 = vpow.pop %v1235
      %v1237 = vmul.f32 %v1110, 1.442695
      %v1238 = vpow.pop %v1237
      %v1239 = vmul.f32 %v1111, 1.442695
      %v1240 = vpow.pop %v1239
      %v1241 = vmul.f32 %v1112, 1.442695
      %v1242 = vpow.pop %v1241
      %v1243 = vmul.f32 %v1113, 1.442695
      %v1244 = vpow.pop %v1243
      %v1245 = vmul.f32 %v1114, 1.442695
      %v1246 = vpow.pop %v1245
      %v1247 = vmul.f32 %v1115, 1.442695
      %v1248 = vpow.pop %v1247
      %v1249 = vmul.f32 %v1116, 1.442695
      %v1250 = vpow.pop %v1249
      %v1251 = vmul.f32 %v1117, 1.442695
      %v1252 = vpow.pop %v1251
      %v1253 = vmul.f32 %v1118, 1.442695
      %v1254 = vpow.pop %v1253
      %v1255 = vmul.f32 %v1119, 1.442695
      %v1256 = vpow.pop %v1255
      %v1257 = vmul.f32 %v1120, 1.442695
      %v1258 = vpow.pop %v1257
      %v1259 = vmul.f32 %v1121, 1.442695
      %v1260 = vpow.pop %v1259
      %v1261 = vmul.f32 %v1122, 1.442695
      %v1262 = vpow.pop %v1261
      %v1263 = vmul.f32 %v1123, 1.442695
      %v1264 = vpow.pop %v1263
      %v1265 = vmul.f32 %v1124, 1.442695
      %v1266 = vpow.pop %v1265
      %v1267 = vmul.f32 %v1125, 1.442695
      %v1268 = vpow.pop %v1267
      %v1269 = vmul.f32 %v1126, 1.442695
      %v1270 = vpow.pop %v1269
      %v1271 = vmul.f32 %v1127, 1.442695
      %v1272 = vpow.pop %v1271
      %v1273 = vmul.f32 %v1128, 1.442695
      %v1274 = vpow.pop %v1273
      %v1275 = vmul.f32 %v1129, 1.442695
      %v1276 = vpow.pop %v1275
      %v1277 = vmul.f32 %v1130, 1.442695
      %v1278 = vpow.pop %v1277
      %v1279 = vmul.f32 %v1131, 1.442695
      %v1280 = vpow.pop %v1279
      %v1281 = vmul.f32 %v1132, 1.442695
      %v1282 = vpow.pop %v1281
      %v1283 = vmul.f32 %v1133, 1.442695
      %v1284 = vpow.pop %v1283
      %v1285 = vmul.f32 %v1134, 1.442695
      %v1286 = vpow.pop %v1285
      %v1287 = vmul.f32 %v1135, 1.442695
      %v1288 = vpow.pop %v1287
      %v1289 = vmul.f32 %v1136, 1.442695
      %v1290 = vpow.pop %v1289
      %v1291 = vmul.f32 %v1137, 1.442695
      %v1292 = vpow.pop %v1291
      %v1293 = vmul.f32 %v1138, 1.442695
      %v1294 = vpow.pop %v1293
      %v1295 = vmul.f32 %v1139, 1.442695
      %v1296 = vpow.pop %v1295
      %v1297 = vmul.f32 %v1140, 1.442695
      %v1298 = vpow.pop %v1297
      %v1299 = vmul.f32 %v1141, 1.442695
      %v1300 = vpow.pop %v1299
      %v1301 = vmul.f32 %v1142, 1.442695
      %v1302 = vpow.pop %v1301
      %v1303 = vmul.f32 %v1143, 1.442695
      %v1304 = vpow.pop %v1303
      %v1305 = vmul.f32 %v1144, 1.442695
      %v1306 = vpow.pop %v1305
      %v1307 = vmul.f32 %v1145, 1.442695
      %v1308 = vpow.pop %v1307
      %v1309 = vmul.f32 %v1146, 1.442695
      %v1310 = vpow.pop %v1309
      %v1311 = vmul.f32 %v1147, 1.442695
      %v1312 = vpow.pop %v1311
      %v1313 = vmul.f32 %v1148, 1.442695
      %v1314 = vpow.pop %v1313
      %v1315 = vmul.f32 %v1149, 1.442695
      %v1316 = vpow.pop %v1315
      %v1317 = vmul.f32 %v1150, 1.442695
      %v1318 = vpow.pop %v1317
      %v1319 = vmul.f32 %v1151, 1.442695
      %v1320 = vpow.pop %v1319
      %v1321 = vmul.f32 %v1152, 1.442695
      %v1322 = vpow.pop %v1321
      %v1323 = vmul.f32 %v1153, 1.442695
      %v1324 = vpow.pop %v1323
      %v1325 = vmul.f32 %v1154, 1.442695
      %v1326 = vpow.pop %v1325
      %v1327 = vmul.f32 %v1155, 1.442695
      %v1328 = vpow.pop %v1327
      %v1329 = vmul.f32 %v1156, 1.442695
      %v1330 = vpow.pop %v1329
      %v1331 = vmul.f32 %v1157, 1.442695
      %v1332 = vpow.pop %v1331
      %v1333 = vmul.f32 %v1158, 1.442695
      %v1334 = vpow.pop %v1333
      %v1335 = vadd.f32 %v1160, 1.0
      %v1336 = vadd.f32 %v1162, 1.0
      %v1337 = vadd.f32 %v1164, 1.0
      %v1338 = vadd.f32 %v1166, 1.0
      %v1339 = vadd.f32 %v1168, 1.0
      %v1340 = vadd.f32 %v1170, 1.0
      %v1341 = vadd.f32 %v1172, 1.0
      %v1342 = vadd.f32 %v1174, 1.0
      %v1343 = vadd.f32 %v1176, 1.0
      %v1344 = vadd.f32 %v1178, 1.0
      %v1345 = vadd.f32 %v1180, 1.0
      %v1346 = vadd.f32 %v1182, 1.0
      %v1347 = vadd.f32 %v1184, 1.0
      %v1348 = vadd.f32 %v1186, 1.0
      %v1349 = vadd.f32 %v1188, 1.0
      %v1350 = vadd.f32 %v1190, 1.0
      %v1351 = vadd.f32 %v1192, 1.0
      %v1352 = vadd.f32 %v1194, 1.0
      %v1353 = vadd.f32 %v1196, 1.0
      %v1354 = vadd.f32 %v1198, 1.0
      %v1355 = vadd.f32 %v1200, 1.0
      %v1356 = vadd.f32 %v1202, 1.0
      %v1357 = vadd.f32 %v1204, 1.0
      %v1358 = vadd.f32 %v1206, 1.0
      %v1359 = vadd.f32 %v1208, 1.0
      %v1360 = vadd.f32 %v1210, 1.0
      %v1361 = vadd.f32 %v1212, 1.0
      %v1362 = vadd.f32 %v1214, 1.0
      %v1363 = vadd.f32 %v1216, 1.0
      %v1364 = vadd.f32 %v1218, 1.0
      %v1365 = vadd.f32 %v1220, 1.0
      %v1366 = vadd.f32 %v1222, 1.0
      %v1367 = vadd.f32 %v1224, 1.0
      %v1368 = vadd.f32 %v1226, 1.0
      %v1369 = vadd.f32 %v1228, 1.0
      %v1370 = vadd.f32 %v1230, 1.0
      %v1371 = vadd.f32 %v1232, 1.0
      %v1372 = vadd.f32 %v1234, 1.0
      %v1373 = vadd.f32 %v1236, 1.0
      %v1374 = vadd.f32 %v1238, 1.0
      %v1375 = vadd.f32 %v1240, 1.0
      %v1376 = vadd.f32 %v1242, 1.0
      %v1377 = vadd.f32 %v1244, 1.0
      %v1378 = vadd.f32 %v1246, 1.0
      %v1379 = vadd.f32 %v1248, 1.0
      %v1380 = vadd.f32 %v1250, 1.0
      %v1381 = vadd.f32 %v1252, 1.0
      %v1382 = vadd.f32 %v1254, 1.0
      %v1383 = vadd.f32 %v1256, 1.0
      %v1384 = vadd.f32 %v1258, 1.0
      %v1385 = vadd.f32 %v1260, 1.0
      %v1386 = vadd.f32 %v1262, 1.0
      %v1387 = vadd.f32 %v1264, 1.0
      %v1388 = vadd.f32 %v1266, 1.0
      %v1389 = vadd.f32 %v1268, 1.0
      %v1390 = vadd.f32 %v1270, 1.0
      %v1391 = vadd.f32 %v1272, 1.0
      %v1392 = vadd.f32 %v1274, 1.0
      %v1393 = vadd.f32 %v1276, 1.0
      %v1394 = vadd.f32 %v1278, 1.0
      %v1395 = vadd.f32 %v1280, 1.0
      %v1396 = vadd.f32 %v1282, 1.0
      %v1397 = vadd.f32 %v1284, 1.0
      %v1398 = vadd.f32 %v1286, 1.0
      %v1399 = vadd.f32 %v1288, 1.0
      %v1400 = vadd.f32 %v1290, 1.0
      %v1401 = vadd.f32 %v1292, 1.0
      %v1402 = vadd.f32 %v1294, 1.0
      %v1403 = vadd.f32 %v1296, 1.0
      %v1404 = vadd.f32 %v1298, 1.0
      %v1405 = vadd.f32 %v1300, 1.0
      %v1406 = vadd.f32 %v1302, 1.0
      %v1407 = vadd.f32 %v1304, 1.0
      %v1408 = vadd.f32 %v1306, 1.0
      %v1409 = vadd.f32 %v1308, 1.0
      %v1410 = vadd.f32 %v1310, 1.0
      %v1411 = vadd.f32 %v1312, 1.0
      %v1412 = vadd.f32 %v1314, 1.0
      %v1413 = vadd.f32 %v1316, 1.0
      %v1414 = vadd.f32 %v1318, 1.0
      %v1415 = vadd.f32 %v1320, 1.0
      %v1416 = vadd.f32 %v1322, 1.0
      %v1417 = vadd.f32 %v1324, 1.0
      %v1418 = vadd.f32 %v1326, 1.0
      %v1419 = vadd.f32 %v1328, 1.0
      %v1420 = vadd.f32 %v1330, 1.0
      %v1421 = vadd.f32 %v1332, 1.0
      %v1422 = vadd.f32 %v1334, 1.0
      %v1423 = vrcp.pop %v1335
      %v1424 = vmul.f32 1.0, %v1423
      %v1425 = vrcp.pop %v1336
      %v1426 = vmul.f32 1.0, %v1425
      %v1427 = vrcp.pop %v1337
      %v1428 = vmul.f32 1.0, %v1427
      %v1429 = vrcp.pop %v1338
      %v1430 = vmul.f32 1.0, %v1429
      %v1431 = vrcp.pop %v1339
      %v1432 = vmul.f32 1.0, %v1431
      %v1433 = vrcp.pop %v1340
      %v1434 = vmul.f32 1.0, %v1433
      %v1435 = vrcp.pop %v1341
      %v1436 = vmul.f32 1.0, %v1435
      %v1437 = vrcp.pop %v1342
      %v1438 = vmul.f32 1.0, %v1437
      %v1439 = vrcp.pop %v1343
      %v1440 = vmul.f32 1.0, %v1439
      %v1441 = vrcp.pop %v1344
      %v1442 = vmul.f32 1.0, %v1441
      %v1443 = vrcp.pop %v1345
      %v1444 = vmul.f32 1.0, %v1443
      %v1445 = vrcp.pop %v1346
      %v1446 = vmul.f32 1.0, %v1445
      %v1447 = vrcp.pop %v1347
      %v1448 = vmul.f32 1.0, %v1447
      %v1449 = vrcp.pop %v1348
      %v1450 = vmul.f32 1.0, %v1449
      %v1451 = vrcp.pop %v1349
      %v1452 = vmul.f32 1.0, %v1451
      %v1453 = vrcp.pop %v1350
      %v1454 = vmul.f32 1.0, %v1453
      %v1455 = vrcp.pop %v1351
      %v1456 = vmul.f32 1.0, %v1455
      %v1457 = vrcp.pop %v1352
      %v1458 = vmul.f32 1.0, %v1457
      %v1459 = vrcp.pop %v1353
      %v1460 = vmul.f32 1.0, %v1459
      %v1461 = vrcp.pop %v1354
      %v1462 = vmul.f32 1.0, %v1461
      %v1463 = vrcp.pop %v1355
      %v1464 = vmul.f32 1.0, %v1463
      %v1465 = vrcp.pop %v1356
      %v1466 = vmul.f32 1.0, %v1465
      %v1467 = vrcp.pop %v1357
      %v1468 = vmul.f32 1.0, %v1467
      %v1469 = vrcp.pop %v1358
      %v1470 = vmul.f32 1.0, %v1469
      %v1471 = vrcp.pop %v1359
      %v1472 = vmul.f32 1.0, %v1471
      %v1473 = vrcp.pop %v1360
      %v1474 = vmul.f32 1.0, %v1473
      %v1475 = vrcp.pop %v1361
      %v1476 = vmul.f32 1.0, %v1475
      %v1477 = vrcp.pop %v1362
      %v1478 = vmul.f32 1.0, %v1477
      %v1479 = vrcp.pop %v1363
      %v1480 = vmul.f32 1.0, %v1479
      %v1481 = vrcp.pop %v1364
      %v1482 = vmul.f32 1.0, %v1481
      %v1483 = vrcp.pop %v1365
      %v1484 = vmul.f32 1.0, %v1483
      %v1485 = vrcp.pop %v1366
      %v1486 = vmul.f32 1.0, %v1485
      %v1487 = vrcp.pop %v1367
      %v1488 = vmul.f32 1.0, %v1487
      %v1489 = vrcp.pop %v1368
      %v1490 = vmul.f32 1.0, %v1489
      %v1491 = vrcp.pop %v1369
      %v1492 = vmul.f32 1.0, %v1491
      %v1493 = vrcp.pop %v1370
      %v1494 = vmul.f32 1.0, %v1493
      %v1495 = vrcp.pop %v1371
      %v1496 = vmul.f32 1.0, %v1495
      %v1497 = vrcp.pop %v1372
      %v1498 = vmul.f32 1.0, %v1497
      %v1499 = vrcp.pop %v1373
      %v1500 = vmul.f32 1.0, %v1499
      %v1501 = vrcp.pop %v1374
      %v1502 = vmul.f32 1.0, %v1501
      %v1503 = vrcp.pop %v1375
      %v1504 = vmul.f32 1.0, %v1503
      %v1505 = vrcp.pop %v1376
      %v1506 = vmul.f32 1.0, %v1505
      %v1507 = vrcp.pop %v1377
      %v1508 = vmul.f32 1.0, %v1507
      %v1509 = vrcp.pop %v1378
      %v1510 = vmul.f32 1.0, %v1509
      %v1511 = vrcp.pop %v1379
      %v1512 = vmul.f32 1.0, %v1511
      %v1513 = vrcp.pop %v1380
      %v1514 = vmul.f32 1.0, %v1513
      %v1515 = vrcp.pop %v1381
      %v1516 = vmul.f32 1.0, %v1515
      %v1517 = vrcp.pop %v1382
      %v1518 = vmul.f32 1.0, %v1517
      %v1519 = vrcp.pop %v1383
      %v1520 = vmul.f32 1.0, %v1519
      %v1521 = vrcp.pop %v1384
      %v1522 = vmul.f32 1.0, %v1521
      %v1523 = vrcp.pop %v1385
      %v1524 = vmul.f32 1.0, %v1523
      %v1525 = vrcp.pop %v1386
      %v1526 = vmul.f32 1.0, %v1525
      %v1527 = vrcp.pop %v1387
      %v1528 = vmul.f32 1.0, %v1527
      %v1529 = vrcp.pop %v1388
      %v1530 = vmul.f32 1.0, %v1529
      %v1531 = vrcp.pop %v1389
      %v1532 = vmul.f32 1.0, %v1531
      %v1533 = vrcp.pop %v1390
      %v1534 = vmul.f32 1.0, %v1533
      %v1535 = vrcp.pop %v1391
      %v1536 = vmul.f32 1.0, %v1535
      %v1537 = vrcp.pop %v1392
      %v1538 = vmul.f32 1.0, %v1537
      %v1539 = vrcp.pop %v1393
      %v1540 = vmul.f32 1.0, %v1539
      %v1541 = vrcp.pop %v1394
      %v1542 = vmul.f32 1.0, %v1541
      %v1543 = vrcp.pop %v1395
      %v1544 = vmul.f32 1.0, %v1543
      %v1545 = vrcp.pop %v1396
      %v1546 = vmul.f32 1.0, %v1545
      %v1547 = vrcp.pop %v1397
      %v1548 = vmul.f32 1.0, %v1547
      %v1549 = vrcp.pop %v1398
      %v1550 = vmul.f32 1.0, %v1549
      %v1551 = vrcp.pop %v1399
      %v1552 = vmul.f32 1.0, %v1551
      %v1553 = vrcp.pop %v1400
      %v1554 = vmul.f32 1.0, %v1553
      %v1555 = vrcp.pop %v1401
      %v1556 = vmul.f32 1.0, %v1555
      %v1557 = vrcp.pop %v1402
      %v1558 = vmul.f32 1.0, %v1557
      %v1559 = vrcp.pop %v1403
      %v1560 = vmul.f32 1.0, %v1559
      %v1561 = vrcp.pop %v1404
      %v1562 = vmul.f32 1.0, %v1561
      %v1563 = vrcp.pop %v1405
      %v1564 = vmul.f32 1.0, %v1563
      %v1565 = vrcp.pop %v1406
      %v1566 = vmul.f32 1.0, %v1565
      %v1567 = vrcp.pop %v1407
      %v1568 = vmul.f32 1.0, %v1567
      %v1569 = vrcp.pop %v1408
      %v1570 = vmul.f32 1.0, %v1569
      %v1571 = vrcp.pop %v1409
      %v1572 = vmul.f32 1.0, %v1571
      %v1573 = vrcp.pop %v1410
      %v1574 = vmul.f32 1.0, %v1573
      %v1575 = vrcp.pop %v1411
      %v1576 = vmul.f32 1.0, %v1575
      %v1577 = vrcp.pop %v1412
      %v1578 = vmul.f32 1.0, %v1577
      %v1579 = vrcp.pop %v1413
      %v1580 = vmul.f32 1.0, %v1579
      %v1581 = vrcp.pop %v1414
      %v1582 = vmul.f32 1.0, %v1581
      %v1583 = vrcp.pop %v1415
      %v1584 = vmul.f32 1.0, %v1583
      %v1585 = vrcp.pop %v1416
      %v1586 = vmul.f32 1.0, %v1585
      %v1587 = vrcp.pop %v1417
      %v1588 = vmul.f32 1.0, %v1587
      %v1589 = vrcp.pop %v1418
      %v1590 = vmul.f32 1.0, %v1589
      %v1591 = vrcp.pop %v1419
      %v1592 = vmul.f32 1.0, %v1591
      %v1593 = vrcp.pop %v1420
      %v1594 = vmul.f32 1.0, %v1593
      %v1595 = vrcp.pop %v1421
      %v1596 = vmul.f32 1.0, %v1595
      %v1597 = vrcp.pop %v1422
      %v1598 = vmul.f32 1.0, %v1597
      %v1599 = vld [vmem:[%s5] sm:$0x1]
      %v1600 = vxor.u32 %v1599, 2147483648
      %v1601 = vmul.f32 %v1600, 1.442695
      %v1602 = vpow.pop %v1601
      %v1603 = vadd.f32 %v1602, 1.0
      %v1604 = vrcp.pop %v1603
      %v1605 = vmul.f32 1.0, %v1604
      %1606 = vst [vmem:[%s251] sm:$0xff] %v1424
      %1607 = vst [vmem:[%s251 + $0x48] sm:$0xff] %v1432
      %1608 = vst [vmem:[%s251 + $0x90] sm:$0xff] %v1440
      %1609 = vst [vmem:[%s251 + $0xd8] sm:$0xff] %v1448
      %1610 = vst [vmem:[%s251 + $0x120] sm:$0xff] %v1456
      %1611 = vst [vmem:[%s251 + $0x168] sm:$0xff] %v1464
      %1612 = vst [vmem:[%s251 + $0x1b0] sm:$0xff] %v1472
      %1613 = vst [vmem:[%s251 + $0x1f8] sm:$0xff] %v1480
      %1614 = vst [vmem:[%s251 + $0x240] sm:$0xff] %v1488
      %1615 = vst [vmem:[%s251 + $0x288] sm:$0xff] %v1496
      %1616 = vst [vmem:[%s251 + $0x2d0] sm:$0xff] %v1504
      %1617 = vst [vmem:[%s251 + $0x318] sm:$0xff] %v1512
      %1618 = vst [vmem:[%s251 + $0x360] sm:$0xff] %v1520
      %1619 = vst [vmem:[%s251 + $0x3a8] sm:$0xff] %v1528
      %1620 = vst [vmem:[%s251 + $0x3f0] sm:$0xff] %v1536
      %1621 = vst [vmem:[%s251 + $0x438] sm:$0xff] %v1544
      %1622 = vst [vmem:[%s251 + $0x480] sm:$0xff] %v1552
      %1623 = vst [vmem:[%s251 + $0x4c8] sm:$0xff] %v1560
      %1624 = vst [vmem:[%s251 + $0x510] sm:$0xff] %v1568
      %1625 = vst [vmem:[%s251 + $0x558] sm:$0xff] %v1576
      %1626 = vst [vmem:[%s251 + $0x5a0] sm:$0xff] %v1584
      %1627 = vst [vmem:[%s251 + $0x5e8] sm:$0x1] %v1592
      %1628 = vst [vmem:[%s251 + $0x8] sm:$0xff] %v1426
      %1629 = vst [vmem:[%s251 + $0x50] sm:$0xff] %v1434
      %1630 = vst [vmem:[%s251 + $0x98] sm:$0xff] %v1442
      %1631 = vst [vmem:[%s251 + $0xe0] sm:$0xff] %v1450
      %1632 = vst [vmem:[%s251 + $0x128] sm:$0xff] %v1458
      %1633 = vst [vmem:[%s251 + $0x170] sm:$0xff] %v1466
      %1634 = vst [vmem:[%s251 + $0x1b8] sm:$0xff] %v1474
      %1635 = vst [vmem:[%s251 + $0x200] sm:$0xff] %v1482
      %1636 = vst [vmem:[%s251 + $0x248] sm:$0xff] %v1490
      %1637 = vst [vmem:[%s251 + $0x290] sm:$0xff] %v1498
      %1638 = vst [vmem:[%s251 + $0x2d8] sm:$0xff] %v1506
      %1639 = vst [vmem:[%s251 + $0x320] sm:$0xff] %v1514
      %1640 = vst [vmem:[%s251 + $0x368] sm:$0xff] %v1522
      %1641 = vst [vmem:[%s251 + $0x3b0] sm:$0xff] %v1530
      %1642 = vst [vmem:[%s251 + $0x3f8] sm:$0xff] %v1538
      %1643 = vst [vmem:[%s251 + $0x440] sm:$0xff] %v1546
      %1644 = vst [vmem:[%s251 + $0x488] sm:$0xff] %v1554
      %1645 = vst [vmem:[%s251 + $0x4d0] sm:$0xff] %v1562
      %1646 = vst [vmem:[%s251 + $0x518] sm:$0xff] %v1570
      %1647 = vst [vmem:[%s251 + $0x560] sm:$0xff] %v1578
      %1648 = vst [vmem:[%s251 + $0x5a8] sm:$0xff] %v1586
      %1649 = vst [vmem:[%s251 + $0x5f0] sm:$0x1] %v1594
      %v1651 = vlaneseq
      %v1652 = vshrl.u32 %v1651, 7
      %v1653 = vsub.s32 0, %v1652
      %v1654 = vrot.slane %v1605, %v1653
      %1656 = vst [vmem:[%s251 + $0x10] sm:$0xff] %v1654
      %1657 = vst [vmem:[%s251 + $0x58] sm:$0xff] %v1654
      %1658 = vst [vmem:[%s251 + $0xa0] sm:$0xff] %v1654
      %1659 = vst [vmem:[%s251 + $0xe8] sm:$0xff] %v1654
      %1660 = vst [vmem:[%s251 + $0x130] sm:$0xff] %v1654
      %1661 = vst [vmem:[%s251 + $0x178] sm:$0xff] %v1654
      %1662 = vst [vmem:[%s251 + $0x1c0] sm:$0xff] %v1654
      %1663 = vst [vmem:[%s251 + $0x208] sm:$0xff] %v1654
      %1664 = vst [vmem:[%s251 + $0x250] sm:$0xff] %v1654
      %1665 = vst [vmem:[%s251 + $0x298] sm:$0xff] %v1654
      %1666 = vst [vmem:[%s251 + $0x2e0] sm:$0xff] %v1654
      %1667 = vst [vmem:[%s251 + $0x328] sm:$0xff] %v1654
      %1668 = vst [vmem:[%s251 + $0x370] sm:$0xff] %v1654
      %1669 = vst [vmem:[%s251 + $0x3b8] sm:$0xff] %v1654
      %1670 = vst [vmem:[%s251 + $0x400] sm:$0xff] %v1654
      %1671 = vst [vmem:[%s251 + $0x448] sm:$0xff] %v1654
      %1672 = vst [vmem:[%s251 + $0x490] sm:$0xff] %v1654
      %1673 = vst [vmem:[%s251 + $0x4d8] sm:$0xff] %v1654
      %1674 = vst [vmem:[%s251 + $0x520] sm:$0xff] %v1654
      %1675 = vst [vmem:[%s251 + $0x568] sm:$0xff] %v1654
      %1676 = vst [vmem:[%s251 + $0x5b0] sm:$0xff] %v1654
      %1677 = vst [vmem:[%s251 + $0x5f8] sm:$0x1] %v1654
      %1678 = vst [vmem:[%s251 + $0x18] sm:$0xff] %v1428
      %1679 = vst [vmem:[%s251 + $0x60] sm:$0xff] %v1436
      %1680 = vst [vmem:[%s251 + $0xa8] sm:$0xff] %v1444
      %1681 = vst [vmem:[%s251 + $0xf0] sm:$0xff] %v1452
      %1682 = vst [vmem:[%s251 + $0x138] sm:$0xff] %v1460
      %1683 = vst [vmem:[%s251 + $0x180] sm:$0xff] %v1468
      %1684 = vst [vmem:[%s251 + $0x1c8] sm:$0xff] %v1476
      %1685 = vst [vmem:[%s251 + $0x210] sm:$0xff] %v1484
      %1686 = vst [vmem:[%s251 + $0x258] sm:$0xff] %v1492
      %1687 = vst [vmem:[%s251 + $0x2a0] sm:$0xff] %v1500
      %1688 = vst [vmem:[%s251 + $0x2e8] sm:$0xff] %v1508
      %1689 = vst [vmem:[%s251 + $0x330] sm:$0xff] %v1516
      %1690 = vst [vmem:[%s251 + $0x378] sm:$0xff] %v1524
      %1691 = vst [vmem:[%s251 + $0x3c0] sm:$0xff] %v1532
      %1692 = vst [vmem:[%s251 + $0x408] sm:$0xff] %v1540
      %1693 = vst [vmem:[%s251 + $0x450] sm:$0xff] %v1548
      %1694 = vst [vmem:[%s251 + $0x498] sm:$0xff] %v1556
      %1695 = vst [vmem:[%s251 + $0x4e0] sm:$0xff] %v1564
      %1696 = vst [vmem:[%s251 + $0x528] sm:$0xff] %v1572
      %1697 = vst [vmem:[%s251 + $0x570] sm:$0xff] %v1580
      %1698 = vst [vmem:[%s251 + $0x5b8] sm:$0xff] %v1588
      %1699 = vst [vmem:[%s251 + $0x600] sm:$0x1] %v1596
      %1700 = vst [vmem:[%s251 + $0x20] sm:$0xff] %v1430
      %1701 = vst [vmem:[%s251 + $0x68] sm:$0xff] %v1438
      %1702 = vst [vmem:[%s251 + $0xb0] sm:$0xff] %v1446
      %1703 = vst [vmem:[%s251 + $0xf8] sm:$0xff] %v1454
      %1704 = vst [vmem:[%s251 + $0x140] sm:$0xff] %v1462
      %1705 = vst [vmem:[%s251 + $0x188] sm:$0xff] %v1470
      %1706 = vst [vmem:[%s251 + $0x1d0] sm:$0xff] %v1478
      %1707 = vst [vmem:[%s251 + $0x218] sm:$0xff] %v1486
      %1708 = vst [vmem:[%s251 + $0x260] sm:$0xff] %v1494
      %1709 = vst [vmem:[%s251 + $0x2a8] sm:$0xff] %v1502
      %1710 = vst [vmem:[%s251 + $0x2f0] sm:$0xff] %v1510
      %1711 = vst [vmem:[%s251 + $0x338] sm:$0xff] %v1518
      %1712 = vst [vmem:[%s251 + $0x380] sm:$0xff] %v1526
      %1713 = vst [vmem:[%s251 + $0x3c8] sm:$0xff] %v1534
      %1714 = vst [vmem:[%s251 + $0x410] sm:$0xff] %v1542
      %1715 = vst [vmem:[%s251 + $0x458] sm:$0xff] %v1550
      %1716 = vst [vmem:[%s251 + $0x4a0] sm:$0xff] %v1558
      %1717 = vst [vmem:[%s251 + $0x4e8] sm:$0xff] %v1566
      %1718 = vst [vmem:[%s251 + $0x530] sm:$0xff] %v1574
      %1719 = vst [vmem:[%s251 + $0x578] sm:$0xff] %v1582
      %1720 = vst [vmem:[%s251 + $0x5c0] sm:$0xff] %v1590
      %1721 = vst [vmem:[%s251 + $0x608] sm:$0x1] %v1598
      %1722 = vst [vmem:[%s251 + $0x28] sm:$0xff] %v1654
      %1723 = vst [vmem:[%s251 + $0x70] sm:$0xff] %v1654
      %1724 = vst [vmem:[%s251 + $0xb8] sm:$0xff] %v1654
      %1725 = vst [vmem:[%s251 + $0x100] sm:$0xff] %v1654
      %1726 = vst [vmem:[%s251 + $0x148] sm:$0xff] %v1654
      %1727 = vst [vmem:[%s251 + $0x190] sm:$0xff] %v1654
      %1728 = vst [vmem:[%s251 + $0x1d8] sm:$0xff] %v1654
      %1729 = vst [vmem:[%s251 + $0x220] sm:$0xff] %v1654
      %1730 = vst [vmem:[%s251 + $0x268] sm:$0xff] %v1654
      %1731 = vst [vmem:[%s251 + $0x2b0] sm:$0xff] %v1654
      %1732 = vst [vmem:[%s251 + $0x2f8] sm:$0xff] %v1654
      %1733 = vst [vmem:[%s251 + $0x340] sm:$0xff] %v1654
      %1734 = vst [vmem:[%s251 + $0x388] sm:$0xff] %v1654
      %1735 = vst [vmem:[%s251 + $0x3d0] sm:$0xff] %v1654
      %1736 = vst [vmem:[%s251 + $0x418] sm:$0xff] %v1654
      %1737 = vst [vmem:[%s251 + $0x460] sm:$0xff] %v1654
      %1738 = vst [vmem:[%s251 + $0x4a8] sm:$0xff] %v1654
      %1739 = vst [vmem:[%s251 + $0x4f0] sm:$0xff] %v1654
      %1740 = vst [vmem:[%s251 + $0x538] sm:$0xff] %v1654
      %1741 = vst [vmem:[%s251 + $0x580] sm:$0xff] %v1654
      %1742 = vst [vmem:[%s251 + $0x5c8] sm:$0xff] %v1654
      %1743 = vst [vmem:[%s251 + $0x610] sm:$0x1] %v1654
      %1744 = vst [vmem:[%s251 + $0x30] sm:$0xff] %v1654
      %1745 = vst [vmem:[%s251 + $0x78] sm:$0xff] %v1654
      %1746 = vst [vmem:[%s251 + $0xc0] sm:$0xff] %v1654
      %1747 = vst [vmem:[%s251 + $0x108] sm:$0xff] %v1654
      %1748 = vst [vmem:[%s251 + $0x150] sm:$0xff] %v1654
      %1749 = vst [vmem:[%s251 + $0x198] sm:$0xff] %v1654
      %1750 = vst [vmem:[%s251 + $0x1e0] sm:$0xff] %v1654
      %1751 = vst [vmem:[%s251 + $0x228] sm:$0xff] %v1654
      %1752 = vst [vmem:[%s251 + $0x270] sm:$0xff] %v1654
      %1753 = vst [vmem:[%s251 + $0x2b8] sm:$0xff] %v1654
      %1754 = vst [vmem:[%s251 + $0x300] sm:$0xff] %v1654
      %1755 = vst [vmem:[%s251 + $0x348] sm:$0xff] %v1654
      %1756 = vst [vmem:[%s251 + $0x390] sm:$0xff] %v1654
      %1757 = vst [vmem:[%s251 + $0x3d8] sm:$0xff] %v1654
      %1758 = vst [vmem:[%s251 + $0x420] sm:$0xff] %v1654
      %1759 = vst [vmem:[%s251 + $0x468] sm:$0xff] %v1654
      %1760 = vst [vmem:[%s251 + $0x4b0] sm:$0xff] %v1654
      %1761 = vst [vmem:[%s251 + $0x4f8] sm:$0xff] %v1654
      %1762 = vst [vmem:[%s251 + $0x540] sm:$0xff] %v1654
      %1763 = vst [vmem:[%s251 + $0x588] sm:$0xff] %v1654
      %1764 = vst [vmem:[%s251 + $0x5d0] sm:$0xff] %v1654
      %1765 = vst [vmem:[%s251 + $0x618] sm:$0x1] %v1654
      %1766 = vst [vmem:[%s251 + $0x38] sm:$0xff] %v1654
      %1767 = vst [vmem:[%s251 + $0x80] sm:$0xff] %v1654
      %1768 = vst [vmem:[%s251 + $0xc8] sm:$0xff] %v1654
      %1769 = vst [vmem:[%s251 + $0x110] sm:$0xff] %v1654
      %1770 = vst [vmem:[%s251 + $0x158] sm:$0xff] %v1654
      %1771 = vst [vmem:[%s251 + $0x1a0] sm:$0xff] %v1654
      %1772 = vst [vmem:[%s251 + $0x1e8] sm:$0xff] %v1654
      %1773 = vst [vmem:[%s251 + $0x230] sm:$0xff] %v1654
      %1774 = vst [vmem:[%s251 + $0x278] sm:$0xff] %v1654
      %1775 = vst [vmem:[%s251 + $0x2c0] sm:$0xff] %v1654
      %1776 = vst [vmem:[%s251 + $0x308] sm:$0xff] %v1654
      %1777 = vst [vmem:[%s251 + $0x350] sm:$0xff] %v1654
      %1778 = vst [vmem:[%s251 + $0x398] sm:$0xff] %v1654
      %1779 = vst [vmem:[%s251 + $0x3e0] sm:$0xff] %v1654
      %1780 = vst [vmem:[%s251 + $0x428] sm:$0xff] %v1654
      %1781 = vst [vmem:[%s251 + $0x470] sm:$0xff] %v1654
      %1782 = vst [vmem:[%s251 + $0x4b8] sm:$0xff] %v1654
      %1783 = vst [vmem:[%s251 + $0x500] sm:$0xff] %v1654
      %1784 = vst [vmem:[%s251 + $0x548] sm:$0xff] %v1654
      %1785 = vst [vmem:[%s251 + $0x590] sm:$0xff] %v1654
      %1786 = vst [vmem:[%s251 + $0x5d8] sm:$0xff] %v1654
      %1787 = vst [vmem:[%s251 + $0x620] sm:$0x1] %v1654
      %1788 = vst [vmem:[%s251 + $0x40] sm:$0xff] %v1654
      %1789 = vst [vmem:[%s251 + $0x88] sm:$0xff] %v1654
      %1790 = vst [vmem:[%s251 + $0xd0] sm:$0xff] %v1654
      %1791 = vst [vmem:[%s251 + $0x118] sm:$0xff] %v1654
      %1792 = vst [vmem:[%s251 + $0x160] sm:$0xff] %v1654
      %1793 = vst [vmem:[%s251 + $0x1a8] sm:$0xff] %v1654
      %1794 = vst [vmem:[%s251 + $0x1f0] sm:$0xff] %v1654
      %1795 = vst [vmem:[%s251 + $0x238] sm:$0xff] %v1654
      %1796 = vst [vmem:[%s251 + $0x280] sm:$0xff] %v1654
      %1797 = vst [vmem:[%s251 + $0x2c8] sm:$0xff] %v1654
      %1798 = vst [vmem:[%s251 + $0x310] sm:$0xff] %v1654
      %1799 = vst [vmem:[%s251 + $0x358] sm:$0xff] %v1654
      %1800 = vst [vmem:[%s251 + $0x3a0] sm:$0xff] %v1654
      %1801 = vst [vmem:[%s251 + $0x3e8] sm:$0xff] %v1654
      %1802 = vst [vmem:[%s251 + $0x430] sm:$0xff] %v1654
      %1803 = vst [vmem:[%s251 + $0x478] sm:$0xff] %v1654
      %1804 = vst [vmem:[%s251 + $0x4c0] sm:$0xff] %v1654
      %1805 = vst [vmem:[%s251 + $0x508] sm:$0xff] %v1654
      %1806 = vst [vmem:[%s251 + $0x550] sm:$0xff] %v1654
      %1807 = vst [vmem:[%s251 + $0x598] sm:$0xff] %v1654
      %1808 = vst [vmem:[%s251 + $0x5e0] sm:$0xff] %v1654
      %1809 = vst [vmem:[%s251 + $0x628] sm:$0x1] %v1654
      %p1810 = scmp.lt.s32.totalorder %s17, 2
      %s1811 = scalar_select %p1810, %s17, 2
      %s1812 = smul.addr %s1811, 198
      %s1813 = smul.addr %s1812, 8
      %s1814 = scalar_lea.vmem %s6, %s1813
      // Predicated region
      $region45: #{model_forward.1} parent=43 // pred_check
        %p1815 = pneg %p166
      $region46: #{model_forward.1} parent=43 // pred_check_branch
        %1817 = sbr.rel (%p1815) target = $region48
      $region47: #{model_forward.1} parent=43 // pred_region
        _
      $region48: #{model_forward.1} parent=43 // pred_fallthru
        _
    $region44: #{model_forward.1} parent=5 // pred_fallthru
      _
    %p1818 = scmp.le.s32.totalorder 2, %s12
    // Predicated region
    $region49: #{model_forward.1} parent=5 // pred_check
      %p1819 = pneg %p1818
    $region50: #{model_forward.1} parent=5 // pred_check_branch
      %1821 = sbr.rel (%p1819) target = $region52
    $region51: #{model_forward.1} parent=5 // pred_region
      %s1822 = ssub.s32 %s12, 2
      // Predicated region
      $region53: #{model_forward.1} parent=51 // pred_check
        %p1823 = pneg %p172
      $region54: #{model_forward.1} parent=51 // pred_check_branch
        %1825 = sbr.rel (%p1823) target = $region56
      $region55: #{model_forward.1} parent=51 // pred_region
        %p1826 = scmp.lt.s32.totalorder %s18, 2
        %s1827 = scalar_select %p1826, %s18, 2
        %s1828 = smul.addr %s1827, 198
        %s1829 = smul.addr %s1828, 8
        %s1830 = scalar_lea.vmem %s6, %s1829
      $region56: #{model_forward.1} parent=51 // pred_fallthru
        _
    $region52: #{model_forward.1} parent=5 // pred_fallthru
      _
  $region6: #{model_forward.1} parent=0 // loop_footer
    %s16 = sadd.s32 1, %s12
  $region7: #{model_forward.1} parent=0 // loop_footer_branch
    %11 = sbr.rel target = $region3
  $region8: #{model_forward.1} parent=0 // loop_exit
    _

</llo_original>
